<compile_context>
chip_gen: v5e
topology: v5e:2x2
jax: 0.10.0
libtpu: 0.0.40
codegen_flags: <defaults>
</compile_context>

<pallas_src>
import jax
import jax.numpy as jnp
from jax import lax
from jax.experimental import pallas as pl
from jax.experimental.pallas import tpu as pltpu


def _round_up(x, m):
    return ((x + m - 1) // m) * m


def _vmem_limit_bytes():
    """Scoped-VMEM limit sized per TPU generation (v7x: 64 MiB/TC, v5e/v6e: 128 MiB)."""
    try:
        cap = int(pltpu.get_tpu_info().vmem_capacity_bytes)
    except Exception:
        cap = 64 << 20
    return int(min(96 << 20, max(32 << 20, (cap * 3) // 4)))


def _tile_and_pad(num_graphs, n):
    """Graphs-per-tile (multiple of 16 for the bf16 edge block) and padded batch."""
    # per-graph in-flight bytes: bf16 edges (double buffered) + f32 temporaries
    per_graph = n * n * (2 * 2 + 6 * 4) + 16 * n * 4
    budget = 16 << 20                              # conservative even for v7x VMEM/TC
    gt = int(min(512, max(16, budget // max(per_graph, 1))))
    gt -= gt % 16
    # don't over-pad a tiny batch, but keep >= 2 grid steps (v7x has 2 TensorCores)
    half = _round_up(max(1, (num_graphs + 1) // 2), 16)
    gt = max(16, min(gt, half))
    padded = _round_up(num_graphs, gt)
    if padded // gt < 2:
        padded += gt
    return gt, padded


# -----------------------------------------------------------------------------
# Fused kernel: one grid step processes a tile of `gt` graphs, fully batched.
# -----------------------------------------------------------------------------
def fused_net_kernel(scal_ref, x_ref, e_ref, g_ref, gb_ref,
                     w3_ref, b3_ref, w4_ref, b4_ref, o_ref):
    f32 = jnp.float32
    n = e_ref.shape[0]                      # node_atom (small, static)

    x = x_ref[...]                          # (gt, N)     x[graph, node]
    e = e_ref[...].astype(f32)              # (N, gt, N)  e[j, b, i] = w(edge j -> i)

    # CGConv lin_f / lin_s parameters over [x_i, x_j, e] (SMEM scalars)
    wf_i, wf_j, wf_e, bf = scal_ref[0], scal_ref[1], scal_ref[2], scal_ref[3]
    ws_i, ws_j, ws_e, bs = scal_ref[4], scal_ref[5], scal_ref[6], scal_ref[7]

    # ---- CGConv + ReLU (dropout = identity in eval), plus weighted in-degree ------
    # Static unroll over the SOURCE node j only (node_atom is a fixed small constant);
    # each iteration is batched over all gt graphs and all target nodes i (lanes).
    aggr = jnp.zeros_like(x)
    deg = jnp.zeros_like(x)
    for j in range(n):
        ej = e[j]                           # (gt, N) weights of edges j -> all targets
        xj = x[:, j:j + 1]                  # (gt, 1) source-node feature
        zf = wf_i * x + wf_j * xj + wf_e * ej + bf
        zs = ws_i * x + ws_j * xj + ws_e * ej + bs
        msg = jax.nn.sigmoid(zf) * jax.nn.softplus(zs)
        aggr = aggr + jnp.where(ej != 0.0, msg, 0.0)
        deg = deg + ej
    h = jnp.maximum(x + aggr, 0.0)          # (gt, N)

    # ---- GCNConv (symmetric norm with edge weights, no self loops) ----------------
    dinv = jnp.where(deg > 0.0, lax.rsqrt(deg), 0.0)
    dh = dinv * h                           # (gt, N)
    s = jnp.zeros_like(dh)
    for j in range(n):                      # batched mat-vec, unrolled over nodes
        s = s + e[j] * dh[:, j:j + 1]       # (gt, N): += w(j->i) * dh_j, all graphs
    v = dinv * s                            # (gt, N)

    # (node, 3-channel) -> (3N,) channel-major re-layout + GCN weight/bias + ReLU,
    # done for the whole tile with one small MXU matmul (g_ref = [gw0*I|gw1*I|gw2*I]).
    feat = jnp.maximum(
        jnp.dot(v, g_ref[...], preferred_element_type=f32) + gb_ref[...], 0.0)

    # ---- Linear(3N, n_h1) + BatchNorm1d(eval, pre-folded) + ReLU -------------------
    z = jnp.dot(feat, w3_ref[...], preferred_element_type=f32) + b3_ref[...]
    z = jnp.maximum(z, 0.0)
    # ---- Linear(n_h1, dim_out) + ReLU (lane-padded to 128 -> dense store) ----------
    z = jnp.dot(z, w4_ref[...], preferred_element_type=f32) + b4_ref[...]
    o_ref[...] = jnp.maximum(z, 0.0)


# -----------------------------------------------------------------------------
# Wrapper / glue
# -----------------------------------------------------------------------------
def net_forward(x, edge_index, edge_attr, batch, num_graphs, node_atom, params):
    B, N = int(num_graphs), int(node_atom)
    NH1 = params["w3"].shape[1]
    DOUT = params["w4"].shape[1]
    NH1P = _round_up(NH1, 128)
    OPAD = _round_up(DOUT, 128)
    TN = 3 * N

    gt, Bp = _tile_and_pad(B, N)
    grid = (Bp // gt,)

    # node features: (B*N, 1) -> (Bp, N), zero padded graphs
    x2d = jnp.pad(x.reshape(B, N).astype(jnp.float32), ((0, Bp - B), (0, 0)))

    # dense edge tensor e[j, b, i] = edge_attr(src=j -> dst=i), shipped as bf16
    # TODO(synk): .at[].set is an XLA scatter; for very large edge counts a Pallas
    # densify kernel (or fusing densification into this kernel) would avoid it.
    src, dst = edge_index[0], edge_index[1]
    g = batch[dst]
    ti = dst - g * N
    sj = src - g * N
    e_dense = (jnp.zeros((N, Bp, N), jnp.float32)
               .at[sj, g, ti].set(edge_attr[:, 0])
               .astype(jnp.bfloat16))

    # CGConv scalar params (SMEM)
    scal = params["cg"].astype(jnp.float32)                            # (8,)

    # GCN weight/bias folded into a (N, 3N) channel-scatter matrix + bias row
    gw = params["gcn_w"].reshape(3).astype(jnp.float32)
    gb = params["gcn_b"].reshape(3).astype(jnp.float32)
    eye_n = jnp.eye(N, dtype=jnp.float32)
    gmat = jnp.concatenate([eye_n * gw[0], eye_n * gw[1], eye_n * gw[2]], axis=1)
    gbias = jnp.repeat(gb, N).reshape(1, TN)

    # eval-mode BatchNorm folded into Linear-3; hidden/output widths lane-padded
    scale = params["gamma"] * lax.rsqrt(params["var"] + 1e-5)          # (1, NH1)
    w3f = (params["w3"] * scale).astype(jnp.float32)                   # (3N, NH1)
    b3f = ((params["b3"] - params["mu"]) * scale + params["beta"]).astype(jnp.float32)
    w3p = jnp.pad(w3f, ((0, 0), (0, NH1P - NH1)))
    b3p = jnp.pad(b3f, ((0, 0), (0, NH1P - NH1)))
    w4p = jnp.pad(params["w4"].astype(jnp.float32),
                  ((0, NH1P - NH1), (0, OPAD - DOUT)))
    b4p = jnp.pad(params["b4"].astype(jnp.float32), ((0, 0), (0, OPAD - DOUT)))

    cost = pl.CostEstimate(
        flops=int(Bp * N * N * 30 + 2 * Bp * (N * TN + TN * NH1P + NH1P * OPAD)),
        transcendentals=int(3 * Bp * N * N),
        bytes_accessed=int(2 * N * Bp * N + 4 * Bp * N + 4 * Bp * OPAD
                           + 4 * (N * TN + TN + TN * NH1P + NH1P
                                  + NH1P * OPAD + OPAD)),
    )

    out = pl.pallas_call(
        fused_net_kernel,
        out_shape=jax.ShapeDtypeStruct((Bp, OPAD), jnp.float32),
        grid=grid,
        in_specs=[
            pl.BlockSpec(memory_space=pltpu.MemorySpace.SMEM),        # CGConv scalars
            pl.BlockSpec((gt, N), lambda t: (t, 0)),                  # node features
            pl.BlockSpec((N, gt, N), lambda t: (0, t, 0)),            # dense edges (bf16)
            pl.BlockSpec((N, TN), lambda t: (0, 0)),                  # GCN scatter matrix
            pl.BlockSpec((1, TN), lambda t: (0, 0)),                  # GCN bias row
            pl.BlockSpec((TN, NH1P), lambda t: (0, 0)),               # w3 (BN folded)
            pl.BlockSpec((1, NH1P), lambda t: (0, 0)),                # b3 (BN folded)
            pl.BlockSpec((NH1P, OPAD), lambda t: (0, 0)),             # w4 (lane padded)
            pl.BlockSpec((1, OPAD), lambda t: (0, 0)),                # b4 (lane padded)
        ],
        out_specs=pl.BlockSpec((gt, OPAD), lambda t: (t, 0)),
        compiler_params=pltpu.CompilerParams(
            dimension_semantics=("parallel",),
            vmem_limit_bytes=_vmem_limit_bytes(),
        ),
        cost_estimate=cost,
    )(scal, x2d, e_dense, gmat, gbias, w3p, b3p, w4p, b4p)

    return out[:B, :DOUT]


# -----------------------------------------------------------------------------
# Pure-JAX reference (explicit mask; same dense math) for a correctness check.
# -----------------------------------------------------------------------------
def reference(x, edge_index, edge_attr, batch, num_graphs, node_atom, params):
    B, N = num_graphs, node_atom
    src, dst = edge_index[0], edge_index[1]
    g = batch[dst]
    ti = dst - g * N
    sj = src - g * N
    E = jnp.zeros((B, N, N), jnp.float32).at[g, ti, sj].set(edge_attr[:, 0])
    M = jnp.zeros((B, N, N), jnp.float32).at[g, ti, sj].set(1.0)

    xd = x.reshape(B, N, 1)
    xi = xd
    xj = jnp.transpose(xd, (0, 2, 1))
    cg = params["cg"]
    zf = cg[0] * xi + cg[1] * xj + cg[2] * E + cg[3]
    zs = cg[4] * xi + cg[5] * xj + cg[6] * E + cg[7]
    msg = M * (jax.nn.sigmoid(zf) * jax.nn.softplus(zs))
    h = jnp.maximum(xd + jnp.sum(msg, axis=2, keepdims=True), 0.0)

    A = M * E
    deg = jnp.sum(A, axis=2, keepdims=True)
    dinv = jnp.where(deg > 0, 1.0 / jnp.sqrt(deg), 0.0)
    hw = h * params["gcn_w"][None]
    out = dinv * jnp.einsum("bij,bjc->bic", A, dinv * hw) + params["gcn_b"][None]
    h2 = jnp.maximum(out, 0.0)

    feat = jnp.transpose(h2, (0, 2, 1)).reshape(B, 3 * N)
    z = feat @ params["w3"] + params["b3"]
    z = (z - params["mu"]) * (params["gamma"] * lax.rsqrt(params["var"] + 1e-5)) + params["beta"]
    z = jnp.maximum(z, 0.0)
    return jnp.maximum(z @ params["w4"] + params["b4"], 0.0)


def make_edges(num_graphs, node_atom):
    src, dst = [], []
    for b in range(num_graphs):
        for n in range(node_atom):
            for k in (1, 3):                                   # simple ring-ish pattern
                src.append(b * node_atom + n)
                dst.append(b * node_atom + (n + k) % node_atom)
    return jnp.array([src, dst], dtype=jnp.int32)


if __name__ == "__main__":
    B, N, NH1, DOUT = 2, 8, 32, 4                              # batch, node_atom, n_h1, dim_out
    key = jax.random.PRNGKey(0)
    ks = jax.random.split(key, 16)

    x = jax.random.normal(ks[0], (B * N, 1), jnp.float32)                       # data.x
    edge_index = make_edges(B, N)                                               # data.edge_index
    n_edges = edge_index.shape[1]
    edge_attr = jax.random.uniform(ks[1], (n_edges, 1), jnp.float32, 0.1, 1.0)  # data.edge_attr
    batch = jnp.repeat(jnp.arange(B, dtype=jnp.int32), N)                       # data.batch

    params = dict(
        # CGConv(1, dim=1): lin_f / lin_s weights over [x_i, x_j, e] + biases
        cg=jax.random.normal(ks[2], (8,), jnp.float32) * 0.5,
        # GCNConv(1, 3): weight (1,3), bias (1,3)
        gcn_w=jax.random.normal(ks[3], (1, 3), jnp.float32) * 0.5,
        gcn_b=jax.random.normal(ks[4], (1, 3), jnp.float32) * 0.1,
        # layer3: Linear(3*node_atom, n_h1) + BatchNorm1d(n_h1) (eval stats)
        w3=jax.random.normal(ks[5], (3 * N, NH1), jnp.float32) / jnp.sqrt(3.0 * N),
        b3=jax.random.normal(ks[6], (1, NH1), jnp.float32) * 0.1,
        gamma=jax.random.uniform(ks[7], (1, NH1), jnp.float32, 0.5, 1.5),
        beta=jax.random.normal(ks[8], (1, NH1), jnp.float32) * 0.1,
        mu=jax.random.normal(ks[9], (1, NH1), jnp.float32) * 0.1,
        var=jax.random.uniform(ks[10], (1, NH1), jnp.float32, 0.5, 1.5),
        # layer4: Linear(n_h1, dim_out)
        w4=jax.random.normal(ks[11], (NH1, DOUT), jnp.float32) / jnp.sqrt(1.0 * NH1),
        b4=jax.random.normal(ks[12], (1, DOUT), jnp.float32) * 0.1,
    )

    out = net_forward(x, edge_index, edge_attr, batch, B, N, params)
    out = jax.block_until_ready(out)

    ref = reference(x, edge_index, edge_attr, batch, B, N, params)
    assert out.shape == (B, DOUT)
    assert jnp.allclose(out, ref, rtol=5e-2, atol=5e-2), (out, ref)
    print("KERNEL_OK")
</pallas_src>

<mosaic_0001>
module attributes {stable_mosaic.version = 11 : i64} {
  func.func @fused_net_kernel(%arg0: i32, %arg1: memref<8xf32, #tpu.memory_space<smem>>, %arg2: memref<16x8xf32, #tpu.memory_space<vmem>>, %arg3: memref<8x16x8xbf16, #tpu.memory_space<vmem>>, %arg4: memref<8x24xf32, #tpu.memory_space<vmem>>, %arg5: memref<1x24xf32, #tpu.memory_space<vmem>>, %arg6: memref<24x128xf32, #tpu.memory_space<vmem>>, %arg7: memref<1x128xf32, #tpu.memory_space<vmem>>, %arg8: memref<128x128xf32, #tpu.memory_space<vmem>>, %arg9: memref<1x128xf32, #tpu.memory_space<vmem>>, %arg10: memref<16x128xf32, #tpu.memory_space<vmem>>) attributes {dimension_semantics = [#tpu.dimension_semantics<parallel>], iteration_bounds = array<i64: 2>, scalar_prefetch = 0 : i64, scratch_operands = 0 : i64, tpu.core_type = #tpu.core_type<tc>, window_params = [{transform_indices = @transform_0, window_bounds = array<i64: 8>}, {transform_indices = @transform_1, window_bounds = array<i64: 16, 8>}, {transform_indices = @transform_2, window_bounds = array<i64: 8, 16, 8>}, {pipeline_mode = #tpu.pipeline_mode<synchronous>, transform_indices = @transform_3, window_bounds = array<i64: 8, 24>}, {pipeline_mode = #tpu.pipeline_mode<synchronous>, transform_indices = @transform_4, window_bounds = array<i64: 1, 24>}, {pipeline_mode = #tpu.pipeline_mode<synchronous>, transform_indices = @transform_5, window_bounds = array<i64: 24, 128>}, {pipeline_mode = #tpu.pipeline_mode<synchronous>, transform_indices = @transform_6, window_bounds = array<i64: 1, 128>}, {pipeline_mode = #tpu.pipeline_mode<synchronous>, transform_indices = @transform_7, window_bounds = array<i64: 128, 128>}, {pipeline_mode = #tpu.pipeline_mode<synchronous>, transform_indices = @transform_8, window_bounds = array<i64: 1, 128>}, {transform_indices = @transform_9, window_bounds = array<i64: 16, 128>}]} {
    %c0 = arith.constant 0 : index
    %c0_0 = arith.constant 0 : index
    %0 = vector.load %arg2[%c0, %c0_0] : memref<16x8xf32, #tpu.memory_space<vmem>>, vector<16x8xf32>
    %c0_1 = arith.constant 0 : index
    %c0_2 = arith.constant 0 : index
    %c0_3 = arith.constant 0 : index
    %1 = vector.load %arg3[%c0_1, %c0_2, %c0_3] : memref<8x16x8xbf16, #tpu.memory_space<vmem>>, vector<8x16x8xbf16>
    %2 = arith.extf %1 : vector<8x16x8xbf16> to vector<8x16x8xf32>
    %c0_4 = arith.constant 0 : index
    %3 = memref.load %arg1[%c0_4] : memref<8xf32, #tpu.memory_space<smem>>
    %c1 = arith.constant 1 : index
    %4 = memref.load %arg1[%c1] : memref<8xf32, #tpu.memory_space<smem>>
    %c2 = arith.constant 2 : index
    %5 = memref.load %arg1[%c2] : memref<8xf32, #tpu.memory_space<smem>>
    %c3 = arith.constant 3 : index
    %6 = memref.load %arg1[%c3] : memref<8xf32, #tpu.memory_space<smem>>
    %c4 = arith.constant 4 : index
    %7 = memref.load %arg1[%c4] : memref<8xf32, #tpu.memory_space<smem>>
    %c5 = arith.constant 5 : index
    %8 = memref.load %arg1[%c5] : memref<8xf32, #tpu.memory_space<smem>>
    %c6 = arith.constant 6 : index
    %9 = memref.load %arg1[%c6] : memref<8xf32, #tpu.memory_space<smem>>
    %c7 = arith.constant 7 : index
    %10 = memref.load %arg1[%c7] : memref<8xf32, #tpu.memory_space<smem>>
    %cst = arith.constant 0.000000e+00 : f32
    %11 = vector.broadcast %cst : f32 to vector<16x8xf32>
    %cst_5 = arith.constant 0.000000e+00 : f32
    %12 = vector.broadcast %cst_5 : f32 to vector<16x8xf32>
    %13 = vector.extract_strided_slice %2 {offsets = [0, 0, 0], sizes = [1, 16, 8], strides = [1, 1, 1]} : vector<8x16x8xf32> to vector<1x16x8xf32>
    %14 = vector.shape_cast %13 : vector<1x16x8xf32> to vector<16x8xf32>
    %15 = vector.extract_strided_slice %0 {offsets = [0, 0], sizes = [16, 1], strides = [1, 1]} : vector<16x8xf32> to vector<16x1xf32>
    %16 = vector.broadcast %3 : f32 to vector<16x8xf32>
    %17 = arith.mulf %16, %0 : vector<16x8xf32>
    %18 = vector.broadcast %4 : f32 to vector<16x1xf32>
    %19 = arith.mulf %18, %15 : vector<16x1xf32>
    %20 = vector.broadcast %19 : vector<16x1xf32> to vector<16x8xf32>
    %21 = arith.addf %17, %20 : vector<16x8xf32>
    %22 = vector.broadcast %5 : f32 to vector<16x8xf32>
    %23 = arith.mulf %22, %14 : vector<16x8xf32>
    %24 = arith.addf %21, %23 : vector<16x8xf32>
    %25 = vector.broadcast %6 : f32 to vector<16x8xf32>
    %26 = arith.addf %24, %25 : vector<16x8xf32>
    %27 = vector.broadcast %7 : f32 to vector<16x8xf32>
    %28 = arith.mulf %27, %0 : vector<16x8xf32>
    %29 = vector.broadcast %8 : f32 to vector<16x1xf32>
    %30 = arith.mulf %29, %15 : vector<16x1xf32>
    %31 = vector.broadcast %30 : vector<16x1xf32> to vector<16x8xf32>
    %32 = arith.addf %28, %31 : vector<16x8xf32>
    %33 = vector.broadcast %9 : f32 to vector<16x8xf32>
    %34 = arith.mulf %33, %14 : vector<16x8xf32>
    %35 = arith.addf %32, %34 : vector<16x8xf32>
    %36 = vector.broadcast %10 : f32 to vector<16x8xf32>
    %37 = arith.addf %35, %36 : vector<16x8xf32>
    %38 = arith.negf %26 : vector<16x8xf32>
    %39 = math.exp %38 : vector<16x8xf32>
    %cst_6 = arith.constant 1.000000e+00 : f32
    %40 = vector.broadcast %cst_6 : f32 to vector<16x8xf32>
    %41 = arith.addf %40, %39 : vector<16x8xf32>
    %42 = arith.divf %40, %41 : vector<16x8xf32>
    %cst_7 = arith.constant 0.000000e+00 : f32
    %43 = vector.broadcast %cst_7 : f32 to vector<16x8xf32>
    %44 = arith.maximumf %37, %43 : vector<16x8xf32>
    %45 = vector.broadcast %cst_7 : f32 to vector<16x8xf32>
    %46 = arith.subf %37, %45 : vector<16x8xf32>
    %47 = arith.cmpf one, %46, %46 : vector<16x8xf32>
    %48 = vector.broadcast %cst_7 : f32 to vector<16x8xf32>
    %49 = arith.addf %37, %48 : vector<16x8xf32>
    %50 = math.absf %46 : vector<16x8xf32>
    %cst_8 = arith.constant 0.000000e+00 : f32
    %51 = vector.broadcast %cst_8 : f32 to vector<16x8xf32>
    %52 = arith.subf %51, %50 : vector<16x8xf32>
    %53 = math.exp %52 : vector<16x8xf32>
    %54 = math.log1p %53 : vector<16x8xf32>
    %55 = arith.addf %44, %54 : vector<16x8xf32>
    %56 = arith.select %47, %49, %55 : vector<16x8xi1>, vector<16x8xf32>
    %57 = arith.mulf %42, %56 : vector<16x8xf32>
    %cst_9 = arith.constant 0.000000e+00 : f32
    %58 = vector.broadcast %cst_9 : f32 to vector<16x8xf32>
    %59 = arith.cmpf one, %14, %58 : vector<16x8xf32>
    %cst_10 = arith.constant 0.000000e+00 : f32
    %60 = vector.broadcast %cst_10 : f32 to vector<16x8xf32>
    %61 = arith.select %59, %57, %60 : vector<16x8xi1>, vector<16x8xf32>
    %62 = arith.addf %11, %61 : vector<16x8xf32>
    %63 = arith.addf %12, %14 : vector<16x8xf32>
    %64 = vector.extract_strided_slice %2 {offsets = [1, 0, 0], sizes = [1, 16, 8], strides = [1, 1, 1]} : vector<8x16x8xf32> to vector<1x16x8xf32>
    %65 = vector.shape_cast %64 : vector<1x16x8xf32> to vector<16x8xf32>
    %66 = vector.extract_strided_slice %0 {offsets = [0, 1], sizes = [16, 1], strides = [1, 1]} : vector<16x8xf32> to vector<16x1xf32>
    %67 = vector.broadcast %3 : f32 to vector<16x8xf32>
    %68 = arith.mulf %67, %0 : vector<16x8xf32>
    %69 = vector.broadcast %4 : f32 to vector<16x1xf32>
    %70 = arith.mulf %69, %66 : vector<16x1xf32>
    %71 = vector.broadcast %70 : vector<16x1xf32> to vector<16x8xf32>
    %72 = arith.addf %68, %71 : vector<16x8xf32>
    %73 = vector.broadcast %5 : f32 to vector<16x8xf32>
    %74 = arith.mulf %73, %65 : vector<16x8xf32>
    %75 = arith.addf %72, %74 : vector<16x8xf32>
    %76 = vector.broadcast %6 : f32 to vector<16x8xf32>
    %77 = arith.addf %75, %76 : vector<16x8xf32>
    %78 = vector.broadcast %7 : f32 to vector<16x8xf32>
    %79 = arith.mulf %78, %0 : vector<16x8xf32>
    %80 = vector.broadcast %8 : f32 to vector<16x1xf32>
    %81 = arith.mulf %80, %66 : vector<16x1xf32>
    %82 = vector.broadcast %81 : vector<16x1xf32> to vector<16x8xf32>
    %83 = arith.addf %79, %82 : vector<16x8xf32>
    %84 = vector.broadcast %9 : f32 to vector<16x8xf32>
    %85 = arith.mulf %84, %65 : vector<16x8xf32>
    %86 = arith.addf %83, %85 : vector<16x8xf32>
    %87 = vector.broadcast %10 : f32 to vector<16x8xf32>
    %88 = arith.addf %86, %87 : vector<16x8xf32>
    %89 = arith.negf %77 : vector<16x8xf32>
    %90 = math.exp %89 : vector<16x8xf32>
    %cst_11 = arith.constant 1.000000e+00 : f32
    %91 = vector.broadcast %cst_11 : f32 to vector<16x8xf32>
    %92 = arith.addf %91, %90 : vector<16x8xf32>
    %93 = arith.divf %91, %92 : vector<16x8xf32>
    %cst_12 = arith.constant 0.000000e+00 : f32
    %94 = vector.broadcast %cst_12 : f32 to vector<16x8xf32>
    %95 = arith.maximumf %88, %94 : vector<16x8xf32>
    %96 = vector.broadcast %cst_12 : f32 to vector<16x8xf32>
    %97 = arith.subf %88, %96 : vector<16x8xf32>
    %98 = arith.cmpf one, %97, %97 : vector<16x8xf32>
    %99 = vector.broadcast %cst_12 : f32 to vector<16x8xf32>
    %100 = arith.addf %88, %99 : vector<16x8xf32>
    %101 = math.absf %97 : vector<16x8xf32>
    %cst_13 = arith.constant 0.000000e+00 : f32
    %102 = vector.broadcast %cst_13 : f32 to vector<16x8xf32>
    %103 = arith.subf %102, %101 : vector<16x8xf32>
    %104 = math.exp %103 : vector<16x8xf32>
    %105 = math.log1p %104 : vector<16x8xf32>
    %106 = arith.addf %95, %105 : vector<16x8xf32>
    %107 = arith.select %98, %100, %106 : vector<16x8xi1>, vector<16x8xf32>
    %108 = arith.mulf %93, %107 : vector<16x8xf32>
    %cst_14 = arith.constant 0.000000e+00 : f32
    %109 = vector.broadcast %cst_14 : f32 to vector<16x8xf32>
    %110 = arith.cmpf one, %65, %109 : vector<16x8xf32>
    %cst_15 = arith.constant 0.000000e+00 : f32
    %111 = vector.broadcast %cst_15 : f32 to vector<16x8xf32>
    %112 = arith.select %110, %108, %111 : vector<16x8xi1>, vector<16x8xf32>
    %113 = arith.addf %62, %112 : vector<16x8xf32>
    %114 = arith.addf %63, %65 : vector<16x8xf32>
    %115 = vector.extract_strided_slice %2 {offsets = [2, 0, 0], sizes = [1, 16, 8], strides = [1, 1, 1]} : vector<8x16x8xf32> to vector<1x16x8xf32>
    %116 = vector.shape_cast %115 : vector<1x16x8xf32> to vector<16x8xf32>
    %117 = vector.extract_strided_slice %0 {offsets = [0, 2], sizes = [16, 1], strides = [1, 1]} : vector<16x8xf32> to vector<16x1xf32>
    %118 = vector.broadcast %3 : f32 to vector<16x8xf32>
    %119 = arith.mulf %118, %0 : vector<16x8xf32>
    %120 = vector.broadcast %4 : f32 to vector<16x1xf32>
    %121 = arith.mulf %120, %117 : vector<16x1xf32>
    %122 = vector.broadcast %121 : vector<16x1xf32> to vector<16x8xf32>
    %123 = arith.addf %119, %122 : vector<16x8xf32>
    %124 = vector.broadcast %5 : f32 to vector<16x8xf32>
    %125 = arith.mulf %124, %116 : vector<16x8xf32>
    %126 = arith.addf %123, %125 : vector<16x8xf32>
    %127 = vector.broadcast %6 : f32 to vector<16x8xf32>
    %128 = arith.addf %126, %127 : vector<16x8xf32>
    %129 = vector.broadcast %7 : f32 to vector<16x8xf32>
    %130 = arith.mulf %129, %0 : vector<16x8xf32>
    %131 = vector.broadcast %8 : f32 to vector<16x1xf32>
    %132 = arith.mulf %131, %117 : vector<16x1xf32>
    %133 = vector.broadcast %132 : vector<16x1xf32> to vector<16x8xf32>
    %134 = arith.addf %130, %133 : vector<16x8xf32>
    %135 = vector.broadcast %9 : f32 to vector<16x8xf32>
    %136 = arith.mulf %135, %116 : vector<16x8xf32>
    %137 = arith.addf %134, %136 : vector<16x8xf32>
    %138 = vector.broadcast %10 : f32 to vector<16x8xf32>
    %139 = arith.addf %137, %138 : vector<16x8xf32>
    %140 = arith.negf %128 : vector<16x8xf32>
    %141 = math.exp %140 : vector<16x8xf32>
    %cst_16 = arith.constant 1.000000e+00 : f32
    %142 = vector.broadcast %cst_16 : f32 to vector<16x8xf32>
    %143 = arith.addf %142, %141 : vector<16x8xf32>
    %144 = arith.divf %142, %143 : vector<16x8xf32>
    %cst_17 = arith.constant 0.000000e+00 : f32
    %145 = vector.broadcast %cst_17 : f32 to vector<16x8xf32>
    %146 = arith.maximumf %139, %145 : vector<16x8xf32>
    %147 = vector.broadcast %cst_17 : f32 to vector<16x8xf32>
    %148 = arith.subf %139, %147 : vector<16x8xf32>
    %149 = arith.cmpf one, %148, %148 : vector<16x8xf32>
    %150 = vector.broadcast %cst_17 : f32 to vector<16x8xf32>
    %151 = arith.addf %139, %150 : vector<16x8xf32>
    %152 = math.absf %148 : vector<16x8xf32>
    %cst_18 = arith.constant 0.000000e+00 : f32
    %153 = vector.broadcast %cst_18 : f32 to vector<16x8xf32>
    %154 = arith.subf %153, %152 : vector<16x8xf32>
    %155 = math.exp %154 : vector<16x8xf32>
    %156 = math.log1p %155 : vector<16x8xf32>
    %157 = arith.addf %146, %156 : vector<16x8xf32>
    %158 = arith.select %149, %151, %157 : vector<16x8xi1>, vector<16x8xf32>
    %159 = arith.mulf %144, %158 : vector<16x8xf32>
    %cst_19 = arith.constant 0.000000e+00 : f32
    %160 = vector.broadcast %cst_19 : f32 to vector<16x8xf32>
    %161 = arith.cmpf one, %116, %160 : vector<16x8xf32>
    %cst_20 = arith.constant 0.000000e+00 : f32
    %162 = vector.broadcast %cst_20 : f32 to vector<16x8xf32>
    %163 = arith.select %161, %159, %162 : vector<16x8xi1>, vector<16x8xf32>
    %164 = arith.addf %113, %163 : vector<16x8xf32>
    %165 = arith.addf %114, %116 : vector<16x8xf32>
    %166 = vector.extract_strided_slice %2 {offsets = [3, 0, 0], sizes = [1, 16, 8], strides = [1, 1, 1]} : vector<8x16x8xf32> to vector<1x16x8xf32>
    %167 = vector.shape_cast %166 : vector<1x16x8xf32> to vector<16x8xf32>
    %168 = vector.extract_strided_slice %0 {offsets = [0, 3], sizes = [16, 1], strides = [1, 1]} : vector<16x8xf32> to vector<16x1xf32>
    %169 = vector.broadcast %3 : f32 to vector<16x8xf32>
    %170 = arith.mulf %169, %0 : vector<16x8xf32>
    %171 = vector.broadcast %4 : f32 to vector<16x1xf32>
    %172 = arith.mulf %171, %168 : vector<16x1xf32>
    %173 = vector.broadcast %172 : vector<16x1xf32> to vector<16x8xf32>
    %174 = arith.addf %170, %173 : vector<16x8xf32>
    %175 = vector.broadcast %5 : f32 to vector<16x8xf32>
    %176 = arith.mulf %175, %167 : vector<16x8xf32>
    %177 = arith.addf %174, %176 : vector<16x8xf32>
    %178 = vector.broadcast %6 : f32 to vector<16x8xf32>
    %179 = arith.addf %177, %178 : vector<16x8xf32>
    %180 = vector.broadcast %7 : f32 to vector<16x8xf32>
    %181 = arith.mulf %180, %0 : vector<16x8xf32>
    %182 = vector.broadcast %8 : f32 to vector<16x1xf32>
    %183 = arith.mulf %182, %168 : vector<16x1xf32>
    %184 = vector.broadcast %183 : vector<16x1xf32> to vector<16x8xf32>
    %185 = arith.addf %181, %184 : vector<16x8xf32>
    %186 = vector.broadcast %9 : f32 to vector<16x8xf32>
    %187 = arith.mulf %186, %167 : vector<16x8xf32>
    %188 = arith.addf %185, %187 : vector<16x8xf32>
    %189 = vector.broadcast %10 : f32 to vector<16x8xf32>
    %190 = arith.addf %188, %189 : vector<16x8xf32>
    %191 = arith.negf %179 : vector<16x8xf32>
    %192 = math.exp %191 : vector<16x8xf32>
    %cst_21 = arith.constant 1.000000e+00 : f32
    %193 = vector.broadcast %cst_21 : f32 to vector<16x8xf32>
    %194 = arith.addf %193, %192 : vector<16x8xf32>
    %195 = arith.divf %193, %194 : vector<16x8xf32>
    %cst_22 = arith.constant 0.000000e+00 : f32
    %196 = vector.broadcast %cst_22 : f32 to vector<16x8xf32>
    %197 = arith.maximumf %190, %196 : vector<16x8xf32>
    %198 = vector.broadcast %cst_22 : f32 to vector<16x8xf32>
    %199 = arith.subf %190, %198 : vector<16x8xf32>
    %200 = arith.cmpf one, %199, %199 : vector<16x8xf32>
    %201 = vector.broadcast %cst_22 : f32 to vector<16x8xf32>
    %202 = arith.addf %190, %201 : vector<16x8xf32>
    %203 = math.absf %199 : vector<16x8xf32>
    %cst_23 = arith.constant 0.000000e+00 : f32
    %204 = vector.broadcast %cst_23 : f32 to vector<16x8xf32>
    %205 = arith.subf %204, %203 : vector<16x8xf32>
    %206 = math.exp %205 : vector<16x8xf32>
    %207 = math.log1p %206 : vector<16x8xf32>
    %208 = arith.addf %197, %207 : vector<16x8xf32>
    %209 = arith.select %200, %202, %208 : vector<16x8xi1>, vector<16x8xf32>
    %210 = arith.mulf %195, %209 : vector<16x8xf32>
    %cst_24 = arith.constant 0.000000e+00 : f32
    %211 = vector.broadcast %cst_24 : f32 to vector<16x8xf32>
    %212 = arith.cmpf one, %167, %211 : vector<16x8xf32>
    %cst_25 = arith.constant 0.000000e+00 : f32
    %213 = vector.broadcast %cst_25 : f32 to vector<16x8xf32>
    %214 = arith.select %212, %210, %213 : vector<16x8xi1>, vector<16x8xf32>
    %215 = arith.addf %164, %214 : vector<16x8xf32>
    %216 = arith.addf %165, %167 : vector<16x8xf32>
    %217 = vector.extract_strided_slice %2 {offsets = [4, 0, 0], sizes = [1, 16, 8], strides = [1, 1, 1]} : vector<8x16x8xf32> to vector<1x16x8xf32>
    %218 = vector.shape_cast %217 : vector<1x16x8xf32> to vector<16x8xf32>
    %219 = vector.extract_strided_slice %0 {offsets = [0, 4], sizes = [16, 1], strides = [1, 1]} : vector<16x8xf32> to vector<16x1xf32>
    %220 = vector.broadcast %3 : f32 to vector<16x8xf32>
    %221 = arith.mulf %220, %0 : vector<16x8xf32>
    %222 = vector.broadcast %4 : f32 to vector<16x1xf32>
    %223 = arith.mulf %222, %219 : vector<16x1xf32>
    %224 = vector.broadcast %223 : vector<16x1xf32> to vector<16x8xf32>
    %225 = arith.addf %221, %224 : vector<16x8xf32>
    %226 = vector.broadcast %5 : f32 to vector<16x8xf32>
    %227 = arith.mulf %226, %218 : vector<16x8xf32>
    %228 = arith.addf %225, %227 : vector<16x8xf32>
    %229 = vector.broadcast %6 : f32 to vector<16x8xf32>
    %230 = arith.addf %228, %229 : vector<16x8xf32>
    %231 = vector.broadcast %7 : f32 to vector<16x8xf32>
    %232 = arith.mulf %231, %0 : vector<16x8xf32>
    %233 = vector.broadcast %8 : f32 to vector<16x1xf32>
    %234 = arith.mulf %233, %219 : vector<16x1xf32>
    %235 = vector.broadcast %234 : vector<16x1xf32> to vector<16x8xf32>
    %236 = arith.addf %232, %235 : vector<16x8xf32>
    %237 = vector.broadcast %9 : f32 to vector<16x8xf32>
    %238 = arith.mulf %237, %218 : vector<16x8xf32>
    %239 = arith.addf %236, %238 : vector<16x8xf32>
    %240 = vector.broadcast %10 : f32 to vector<16x8xf32>
    %241 = arith.addf %239, %240 : vector<16x8xf32>
    %242 = arith.negf %230 : vector<16x8xf32>
    %243 = math.exp %242 : vector<16x8xf32>
    %cst_26 = arith.constant 1.000000e+00 : f32
    %244 = vector.broadcast %cst_26 : f32 to vector<16x8xf32>
    %245 = arith.addf %244, %243 : vector<16x8xf32>
    %246 = arith.divf %244, %245 : vector<16x8xf32>
    %cst_27 = arith.constant 0.000000e+00 : f32
    %247 = vector.broadcast %cst_27 : f32 to vector<16x8xf32>
    %248 = arith.maximumf %241, %247 : vector<16x8xf32>
    %249 = vector.broadcast %cst_27 : f32 to vector<16x8xf32>
    %250 = arith.subf %241, %249 : vector<16x8xf32>
    %251 = arith.cmpf one, %250, %250 : vector<16x8xf32>
    %252 = vector.broadcast %cst_27 : f32 to vector<16x8xf32>
    %253 = arith.addf %241, %252 : vector<16x8xf32>
    %254 = math.absf %250 : vector<16x8xf32>
    %cst_28 = arith.constant 0.000000e+00 : f32
    %255 = vector.broadcast %cst_28 : f32 to vector<16x8xf32>
    %256 = arith.subf %255, %254 : vector<16x8xf32>
    %257 = math.exp %256 : vector<16x8xf32>
    %258 = math.log1p %257 : vector<16x8xf32>
    %259 = arith.addf %248, %258 : vector<16x8xf32>
    %260 = arith.select %251, %253, %259 : vector<16x8xi1>, vector<16x8xf32>
    %261 = arith.mulf %246, %260 : vector<16x8xf32>
    %cst_29 = arith.constant 0.000000e+00 : f32
    %262 = vector.broadcast %cst_29 : f32 to vector<16x8xf32>
    %263 = arith.cmpf one, %218, %262 : vector<16x8xf32>
    %cst_30 = arith.constant 0.000000e+00 : f32
    %264 = vector.broadcast %cst_30 : f32 to vector<16x8xf32>
    %265 = arith.select %263, %261, %264 : vector<16x8xi1>, vector<16x8xf32>
    %266 = arith.addf %215, %265 : vector<16x8xf32>
    %267 = arith.addf %216, %218 : vector<16x8xf32>
    %268 = vector.extract_strided_slice %2 {offsets = [5, 0, 0], sizes = [1, 16, 8], strides = [1, 1, 1]} : vector<8x16x8xf32> to vector<1x16x8xf32>
    %269 = vector.shape_cast %268 : vector<1x16x8xf32> to vector<16x8xf32>
    %270 = vector.extract_strided_slice %0 {offsets = [0, 5], sizes = [16, 1], strides = [1, 1]} : vector<16x8xf32> to vector<16x1xf32>
    %271 = vector.broadcast %3 : f32 to vector<16x8xf32>
    %272 = arith.mulf %271, %0 : vector<16x8xf32>
    %273 = vector.broadcast %4 : f32 to vector<16x1xf32>
    %274 = arith.mulf %273, %270 : vector<16x1xf32>
    %275 = vector.broadcast %274 : vector<16x1xf32> to vector<16x8xf32>
    %276 = arith.addf %272, %275 : vector<16x8xf32>
    %277 = vector.broadcast %5 : f32 to vector<16x8xf32>
    %278 = arith.mulf %277, %269 : vector<16x8xf32>
    %279 = arith.addf %276, %278 : vector<16x8xf32>
    %280 = vector.broadcast %6 : f32 to vector<16x8xf32>
    %281 = arith.addf %279, %280 : vector<16x8xf32>
    %282 = vector.broadcast %7 : f32 to vector<16x8xf32>
    %283 = arith.mulf %282, %0 : vector<16x8xf32>
    %284 = vector.broadcast %8 : f32 to vector<16x1xf32>
    %285 = arith.mulf %284, %270 : vector<16x1xf32>
    %286 = vector.broadcast %285 : vector<16x1xf32> to vector<16x8xf32>
    %287 = arith.addf %283, %286 : vector<16x8xf32>
    %288 = vector.broadcast %9 : f32 to vector<16x8xf32>
    %289 = arith.mulf %288, %269 : vector<16x8xf32>
    %290 = arith.addf %287, %289 : vector<16x8xf32>
    %291 = vector.broadcast %10 : f32 to vector<16x8xf32>
    %292 = arith.addf %290, %291 : vector<16x8xf32>
    %293 = arith.negf %281 : vector<16x8xf32>
    %294 = math.exp %293 : vector<16x8xf32>
    %cst_31 = arith.constant 1.000000e+00 : f32
    %295 = vector.broadcast %cst_31 : f32 to vector<16x8xf32>
    %296 = arith.addf %295, %294 : vector<16x8xf32>
    %297 = arith.divf %295, %296 : vector<16x8xf32>
    %cst_32 = arith.constant 0.000000e+00 : f32
    %298 = vector.broadcast %cst_32 : f32 to vector<16x8xf32>
    %299 = arith.maximumf %292, %298 : vector<16x8xf32>
    %300 = vector.broadcast %cst_32 : f32 to vector<16x8xf32>
    %301 = arith.subf %292, %300 : vector<16x8xf32>
    %302 = arith.cmpf one, %301, %301 : vector<16x8xf32>
    %303 = vector.broadcast %cst_32 : f32 to vector<16x8xf32>
    %304 = arith.addf %292, %303 : vector<16x8xf32>
    %305 = math.absf %301 : vector<16x8xf32>
    %cst_33 = arith.constant 0.000000e+00 : f32
    %306 = vector.broadcast %cst_33 : f32 to vector<16x8xf32>
    %307 = arith.subf %306, %305 : vector<16x8xf32>
    %308 = math.exp %307 : vector<16x8xf32>
    %309 = math.log1p %308 : vector<16x8xf32>
    %310 = arith.addf %299, %309 : vector<16x8xf32>
    %311 = arith.select %302, %304, %310 : vector<16x8xi1>, vector<16x8xf32>
    %312 = arith.mulf %297, %311 : vector<16x8xf32>
    %cst_34 = arith.constant 0.000000e+00 : f32
    %313 = vector.broadcast %cst_34 : f32 to vector<16x8xf32>
    %314 = arith.cmpf one, %269, %313 : vector<16x8xf32>
    %cst_35 = arith.constant 0.000000e+00 : f32
    %315 = vector.broadcast %cst_35 : f32 to vector<16x8xf32>
    %316 = arith.select %314, %312, %315 : vector<16x8xi1>, vector<16x8xf32>
    %317 = arith.addf %266, %316 : vector<16x8xf32>
    %318 = arith.addf %267, %269 : vector<16x8xf32>
    %319 = vector.extract_strided_slice %2 {offsets = [6, 0, 0], sizes = [1, 16, 8], strides = [1, 1, 1]} : vector<8x16x8xf32> to vector<1x16x8xf32>
    %320 = vector.shape_cast %319 : vector<1x16x8xf32> to vector<16x8xf32>
    %321 = vector.extract_strided_slice %0 {offsets = [0, 6], sizes = [16, 1], strides = [1, 1]} : vector<16x8xf32> to vector<16x1xf32>
    %322 = vector.broadcast %3 : f32 to vector<16x8xf32>
    %323 = arith.mulf %322, %0 : vector<16x8xf32>
    %324 = vector.broadcast %4 : f32 to vector<16x1xf32>
    %325 = arith.mulf %324, %321 : vector<16x1xf32>
    %326 = vector.broadcast %325 : vector<16x1xf32> to vector<16x8xf32>
    %327 = arith.addf %323, %326 : vector<16x8xf32>
    %328 = vector.broadcast %5 : f32 to vector<16x8xf32>
    %329 = arith.mulf %328, %320 : vector<16x8xf32>
    %330 = arith.addf %327, %329 : vector<16x8xf32>
    %331 = vector.broadcast %6 : f32 to vector<16x8xf32>
    %332 = arith.addf %330, %331 : vector<16x8xf32>
    %333 = vector.broadcast %7 : f32 to vector<16x8xf32>
    %334 = arith.mulf %333, %0 : vector<16x8xf32>
    %335 = vector.broadcast %8 : f32 to vector<16x1xf32>
    %336 = arith.mulf %335, %321 : vector<16x1xf32>
    %337 = vector.broadcast %336 : vector<16x1xf32> to vector<16x8xf32>
    %338 = arith.addf %334, %337 : vector<16x8xf32>
    %339 = vector.broadcast %9 : f32 to vector<16x8xf32>
    %340 = arith.mulf %339, %320 : vector<16x8xf32>
    %341 = arith.addf %338, %340 : vector<16x8xf32>
    %342 = vector.broadcast %10 : f32 to vector<16x8xf32>
    %343 = arith.addf %341, %342 : vector<16x8xf32>
    %344 = arith.negf %332 : vector<16x8xf32>
    %345 = math.exp %344 : vector<16x8xf32>
    %cst_36 = arith.constant 1.000000e+00 : f32
    %346 = vector.broadcast %cst_36 : f32 to vector<16x8xf32>
    %347 = arith.addf %346, %345 : vector<16x8xf32>
    %348 = arith.divf %346, %347 : vector<16x8xf32>
    %cst_37 = arith.constant 0.000000e+00 : f32
    %349 = vector.broadcast %cst_37 : f32 to vector<16x8xf32>
    %350 = arith.maximumf %343, %349 : vector<16x8xf32>
    %351 = vector.broadcast %cst_37 : f32 to vector<16x8xf32>
    %352 = arith.subf %343, %351 : vector<16x8xf32>
    %353 = arith.cmpf one, %352, %352 : vector<16x8xf32>
    %354 = vector.broadcast %cst_37 : f32 to vector<16x8xf32>
    %355 = arith.addf %343, %354 : vector<16x8xf32>
    %356 = math.absf %352 : vector<16x8xf32>
    %cst_38 = arith.constant 0.000000e+00 : f32
    %357 = vector.broadcast %cst_38 : f32 to vector<16x8xf32>
    %358 = arith.subf %357, %356 : vector<16x8xf32>
    %359 = math.exp %358 : vector<16x8xf32>
    %360 = math.log1p %359 : vector<16x8xf32>
    %361 = arith.addf %350, %360 : vector<16x8xf32>
    %362 = arith.select %353, %355, %361 : vector<16x8xi1>, vector<16x8xf32>
    %363 = arith.mulf %348, %362 : vector<16x8xf32>
    %cst_39 = arith.constant 0.000000e+00 : f32
    %364 = vector.broadcast %cst_39 : f32 to vector<16x8xf32>
    %365 = arith.cmpf one, %320, %364 : vector<16x8xf32>
    %cst_40 = arith.constant 0.000000e+00 : f32
    %366 = vector.broadcast %cst_40 : f32 to vector<16x8xf32>
    %367 = arith.select %365, %363, %366 : vector<16x8xi1>, vector<16x8xf32>
    %368 = arith.addf %317, %367 : vector<16x8xf32>
    %369 = arith.addf %318, %320 : vector<16x8xf32>
    %370 = vector.extract_strided_slice %2 {offsets = [7, 0, 0], sizes = [1, 16, 8], strides = [1, 1, 1]} : vector<8x16x8xf32> to vector<1x16x8xf32>
    %371 = vector.shape_cast %370 : vector<1x16x8xf32> to vector<16x8xf32>
    %372 = vector.extract_strided_slice %0 {offsets = [0, 7], sizes = [16, 1], strides = [1, 1]} : vector<16x8xf32> to vector<16x1xf32>
    %373 = vector.broadcast %3 : f32 to vector<16x8xf32>
    %374 = arith.mulf %373, %0 : vector<16x8xf32>
    %375 = vector.broadcast %4 : f32 to vector<16x1xf32>
    %376 = arith.mulf %375, %372 : vector<16x1xf32>
    %377 = vector.broadcast %376 : vector<16x1xf32> to vector<16x8xf32>
    %378 = arith.addf %374, %377 : vector<16x8xf32>
    %379 = vector.broadcast %5 : f32 to vector<16x8xf32>
    %380 = arith.mulf %379, %371 : vector<16x8xf32>
    %381 = arith.addf %378, %380 : vector<16x8xf32>
    %382 = vector.broadcast %6 : f32 to vector<16x8xf32>
    %383 = arith.addf %381, %382 : vector<16x8xf32>
    %384 = vector.broadcast %7 : f32 to vector<16x8xf32>
    %385 = arith.mulf %384, %0 : vector<16x8xf32>
    %386 = vector.broadcast %8 : f32 to vector<16x1xf32>
    %387 = arith.mulf %386, %372 : vector<16x1xf32>
    %388 = vector.broadcast %387 : vector<16x1xf32> to vector<16x8xf32>
    %389 = arith.addf %385, %388 : vector<16x8xf32>
    %390 = vector.broadcast %9 : f32 to vector<16x8xf32>
    %391 = arith.mulf %390, %371 : vector<16x8xf32>
    %392 = arith.addf %389, %391 : vector<16x8xf32>
    %393 = vector.broadcast %10 : f32 to vector<16x8xf32>
    %394 = arith.addf %392, %393 : vector<16x8xf32>
    %395 = arith.negf %383 : vector<16x8xf32>
    %396 = math.exp %395 : vector<16x8xf32>
    %cst_41 = arith.constant 1.000000e+00 : f32
    %397 = vector.broadcast %cst_41 : f32 to vector<16x8xf32>
    %398 = arith.addf %397, %396 : vector<16x8xf32>
    %399 = arith.divf %397, %398 : vector<16x8xf32>
    %cst_42 = arith.constant 0.000000e+00 : f32
    %400 = vector.broadcast %cst_42 : f32 to vector<16x8xf32>
    %401 = arith.maximumf %394, %400 : vector<16x8xf32>
    %402 = vector.broadcast %cst_42 : f32 to vector<16x8xf32>
    %403 = arith.subf %394, %402 : vector<16x8xf32>
    %404 = arith.cmpf one, %403, %403 : vector<16x8xf32>
    %405 = vector.broadcast %cst_42 : f32 to vector<16x8xf32>
    %406 = arith.addf %394, %405 : vector<16x8xf32>
    %407 = math.absf %403 : vector<16x8xf32>
    %cst_43 = arith.constant 0.000000e+00 : f32
    %408 = vector.broadcast %cst_43 : f32 to vector<16x8xf32>
    %409 = arith.subf %408, %407 : vector<16x8xf32>
    %410 = math.exp %409 : vector<16x8xf32>
    %411 = math.log1p %410 : vector<16x8xf32>
    %412 = arith.addf %401, %411 : vector<16x8xf32>
    %413 = arith.select %404, %406, %412 : vector<16x8xi1>, vector<16x8xf32>
    %414 = arith.mulf %399, %413 : vector<16x8xf32>
    %cst_44 = arith.constant 0.000000e+00 : f32
    %415 = vector.broadcast %cst_44 : f32 to vector<16x8xf32>
    %416 = arith.cmpf one, %371, %415 : vector<16x8xf32>
    %cst_45 = arith.constant 0.000000e+00 : f32
    %417 = vector.broadcast %cst_45 : f32 to vector<16x8xf32>
    %418 = arith.select %416, %414, %417 : vector<16x8xi1>, vector<16x8xf32>
    %419 = arith.addf %368, %418 : vector<16x8xf32>
    %420 = arith.addf %369, %371 : vector<16x8xf32>
    %421 = arith.addf %0, %419 : vector<16x8xf32>
    %cst_46 = arith.constant 0.000000e+00 : f32
    %422 = vector.broadcast %cst_46 : f32 to vector<16x8xf32>
    %423 = arith.maximumf %421, %422 : vector<16x8xf32>
    %cst_47 = arith.constant 0.000000e+00 : f32
    %424 = vector.broadcast %cst_47 : f32 to vector<16x8xf32>
    %425 = arith.cmpf ogt, %420, %424 : vector<16x8xf32>
    %426 = math.rsqrt %420 : vector<16x8xf32>
    %cst_48 = arith.constant 0.000000e+00 : f32
    %427 = vector.broadcast %cst_48 : f32 to vector<16x8xf32>
    %428 = arith.select %425, %426, %427 : vector<16x8xi1>, vector<16x8xf32>
    %429 = arith.mulf %428, %423 : vector<16x8xf32>
    %cst_49 = arith.constant 0.000000e+00 : f32
    %430 = vector.broadcast %cst_49 : f32 to vector<16x8xf32>
    %431 = vector.extract_strided_slice %2 {offsets = [0, 0, 0], sizes = [1, 16, 8], strides = [1, 1, 1]} : vector<8x16x8xf32> to vector<1x16x8xf32>
    %432 = vector.shape_cast %431 : vector<1x16x8xf32> to vector<16x8xf32>
    %433 = vector.extract_strided_slice %429 {offsets = [0, 0], sizes = [16, 1], strides = [1, 1]} : vector<16x8xf32> to vector<16x1xf32>
    %434 = vector.broadcast %433 : vector<16x1xf32> to vector<16x8xf32>
    %435 = arith.mulf %432, %434 : vector<16x8xf32>
    %436 = arith.addf %430, %435 : vector<16x8xf32>
    %437 = vector.extract_strided_slice %2 {offsets = [1, 0, 0], sizes = [1, 16, 8], strides = [1, 1, 1]} : vector<8x16x8xf32> to vector<1x16x8xf32>
    %438 = vector.shape_cast %437 : vector<1x16x8xf32> to vector<16x8xf32>
    %439 = vector.extract_strided_slice %429 {offsets = [0, 1], sizes = [16, 1], strides = [1, 1]} : vector<16x8xf32> to vector<16x1xf32>
    %440 = vector.broadcast %439 : vector<16x1xf32> to vector<16x8xf32>
    %441 = arith.mulf %438, %440 : vector<16x8xf32>
    %442 = arith.addf %436, %441 : vector<16x8xf32>
    %443 = vector.extract_strided_slice %2 {offsets = [2, 0, 0], sizes = [1, 16, 8], strides = [1, 1, 1]} : vector<8x16x8xf32> to vector<1x16x8xf32>
    %444 = vector.shape_cast %443 : vector<1x16x8xf32> to vector<16x8xf32>
    %445 = vector.extract_strided_slice %429 {offsets = [0, 2], sizes = [16, 1], strides = [1, 1]} : vector<16x8xf32> to vector<16x1xf32>
    %446 = vector.broadcast %445 : vector<16x1xf32> to vector<16x8xf32>
    %447 = arith.mulf %444, %446 : vector<16x8xf32>
    %448 = arith.addf %442, %447 : vector<16x8xf32>
    %449 = vector.extract_strided_slice %2 {offsets = [3, 0, 0], sizes = [1, 16, 8], strides = [1, 1, 1]} : vector<8x16x8xf32> to vector<1x16x8xf32>
    %450 = vector.shape_cast %449 : vector<1x16x8xf32> to vector<16x8xf32>
    %451 = vector.extract_strided_slice %429 {offsets = [0, 3], sizes = [16, 1], strides = [1, 1]} : vector<16x8xf32> to vector<16x1xf32>
    %452 = vector.broadcast %451 : vector<16x1xf32> to vector<16x8xf32>
    %453 = arith.mulf %450, %452 : vector<16x8xf32>
    %454 = arith.addf %448, %453 : vector<16x8xf32>
    %455 = vector.extract_strided_slice %2 {offsets = [4, 0, 0], sizes = [1, 16, 8], strides = [1, 1, 1]} : vector<8x16x8xf32> to vector<1x16x8xf32>
    %456 = vector.shape_cast %455 : vector<1x16x8xf32> to vector<16x8xf32>
    %457 = vector.extract_strided_slice %429 {offsets = [0, 4], sizes = [16, 1], strides = [1, 1]} : vector<16x8xf32> to vector<16x1xf32>
    %458 = vector.broadcast %457 : vector<16x1xf32> to vector<16x8xf32>
    %459 = arith.mulf %456, %458 : vector<16x8xf32>
    %460 = arith.addf %454, %459 : vector<16x8xf32>
    %461 = vector.extract_strided_slice %2 {offsets = [5, 0, 0], sizes = [1, 16, 8], strides = [1, 1, 1]} : vector<8x16x8xf32> to vector<1x16x8xf32>
    %462 = vector.shape_cast %461 : vector<1x16x8xf32> to vector<16x8xf32>
    %463 = vector.extract_strided_slice %429 {offsets = [0, 5], sizes = [16, 1], strides = [1, 1]} : vector<16x8xf32> to vector<16x1xf32>
    %464 = vector.broadcast %463 : vector<16x1xf32> to vector<16x8xf32>
    %465 = arith.mulf %462, %464 : vector<16x8xf32>
    %466 = arith.addf %460, %465 : vector<16x8xf32>
    %467 = vector.extract_strided_slice %2 {offsets = [6, 0, 0], sizes = [1, 16, 8], strides = [1, 1, 1]} : vector<8x16x8xf32> to vector<1x16x8xf32>
    %468 = vector.shape_cast %467 : vector<1x16x8xf32> to vector<16x8xf32>
    %469 = vector.extract_strided_slice %429 {offsets = [0, 6], sizes = [16, 1], strides = [1, 1]} : vector<16x8xf32> to vector<16x1xf32>
    %470 = vector.broadcast %469 : vector<16x1xf32> to vector<16x8xf32>
    %471 = arith.mulf %468, %470 : vector<16x8xf32>
    %472 = arith.addf %466, %471 : vector<16x8xf32>
    %473 = vector.extract_strided_slice %2 {offsets = [7, 0, 0], sizes = [1, 16, 8], strides = [1, 1, 1]} : vector<8x16x8xf32> to vector<1x16x8xf32>
    %474 = vector.shape_cast %473 : vector<1x16x8xf32> to vector<16x8xf32>
    %475 = vector.extract_strided_slice %429 {offsets = [0, 7], sizes = [16, 1], strides = [1, 1]} : vector<16x8xf32> to vector<16x1xf32>
    %476 = vector.broadcast %475 : vector<16x1xf32> to vector<16x8xf32>
    %477 = arith.mulf %474, %476 : vector<16x8xf32>
    %478 = arith.addf %472, %477 : vector<16x8xf32>
    %479 = arith.mulf %428, %478 : vector<16x8xf32>
    %c0_50 = arith.constant 0 : index
    %c0_51 = arith.constant 0 : index
    %480 = vector.load %arg4[%c0_50, %c0_51] : memref<8x24xf32, #tpu.memory_space<vmem>>, vector<8x24xf32>
    %cst_52 = arith.constant dense<0.000000e+00> : vector<16x24xf32>
    %481 = tpu.matmul %479, %480, %cst_52 {dimension_numbers = #tpu.dot_dimension_numbers<[1], [0], [0], [1], [0, 0, 1, 1], [], []>} : vector<16x8xf32>, vector<8x24xf32>, vector<16x24xf32> -> vector<16x24xf32>
    %c0_53 = arith.constant 0 : index
    %c0_54 = arith.constant 0 : index
    %482 = vector.load %arg5[%c0_53, %c0_54] : memref<1x24xf32, #tpu.memory_space<vmem>>, vector<1x24xf32>
    %483 = vector.broadcast %482 : vector<1x24xf32> to vector<16x24xf32>
    %484 = arith.addf %481, %483 : vector<16x24xf32>
    %cst_55 = arith.constant 0.000000e+00 : f32
    %485 = vector.broadcast %cst_55 : f32 to vector<16x24xf32>
    %486 = arith.maximumf %484, %485 : vector<16x24xf32>
    %c0_56 = arith.constant 0 : index
    %c0_57 = arith.constant 0 : index
    %487 = vector.load %arg6[%c0_56, %c0_57] : memref<24x128xf32, #tpu.memory_space<vmem>>, vector<24x128xf32>
    %cst_58 = arith.constant dense<0.000000e+00> : vector<16x128xf32>
    %488 = tpu.matmul %486, %487, %cst_58 {dimension_numbers = #tpu.dot_dimension_numbers<[1], [0], [0], [1], [0, 0, 1, 1], [], []>} : vector<16x24xf32>, vector<24x128xf32>, vector<16x128xf32> -> vector<16x128xf32>
    %c0_59 = arith.constant 0 : index
    %c0_60 = arith.constant 0 : index
    %489 = vector.load %arg7[%c0_59, %c0_60] : memref<1x128xf32, #tpu.memory_space<vmem>>, vector<1x128xf32>
    %490 = vector.broadcast %489 : vector<1x128xf32> to vector<16x128xf32>
    %491 = arith.addf %488, %490 : vector<16x128xf32>
    %cst_61 = arith.constant 0.000000e+00 : f32
    %492 = vector.broadcast %cst_61 : f32 to vector<16x128xf32>
    %493 = arith.maximumf %491, %492 : vector<16x128xf32>
    %c0_62 = arith.constant 0 : index
    %c0_63 = arith.constant 0 : index
    %494 = vector.load %arg8[%c0_62, %c0_63] : memref<128x128xf32, #tpu.memory_space<vmem>>, vector<128x128xf32>
    %cst_64 = arith.constant dense<0.000000e+00> : vector<16x128xf32>
    %495 = tpu.matmul %493, %494, %cst_64 {dimension_numbers = #tpu.dot_dimension_numbers<[1], [0], [0], [1], [0, 0, 1, 1], [], []>} : vector<16x128xf32>, vector<128x128xf32>, vector<16x128xf32> -> vector<16x128xf32>
    %c0_65 = arith.constant 0 : index
    %c0_66 = arith.constant 0 : index
    %496 = vector.load %arg9[%c0_65, %c0_66] : memref<1x128xf32, #tpu.memory_space<vmem>>, vector<1x128xf32>
    %497 = vector.broadcast %496 : vector<1x128xf32> to vector<16x128xf32>
    %498 = arith.addf %495, %497 : vector<16x128xf32>
    %cst_67 = arith.constant 0.000000e+00 : f32
    %499 = vector.broadcast %cst_67 : f32 to vector<16x128xf32>
    %500 = arith.maximumf %498, %499 : vector<16x128xf32>
    %c0_68 = arith.constant 0 : index
    %c0_69 = arith.constant 0 : index
    %501 = vector.load %arg10[%c0_68, %c0_69] : memref<16x128xf32, #tpu.memory_space<vmem>>, vector<16x128xf32>
    tpu.vector_store %arg10[%c0_68, %c0_69], %500 {strides = array<i32>} : memref<16x128xf32, #tpu.memory_space<vmem>>, vector<16x128xf32>,
    return
  }
  func.func @transform_0(%arg0: i32) -> i32 {
    %c0_i32 = arith.constant 0 : i32
    %c0_i32_0 = arith.constant 0 : i32
    return %c0_i32 : i32
  }
  func.func @transform_1(%arg0: i32) -> (i32, i32) {
    %c0_i32 = arith.constant 0 : i32
    %c0_i32_0 = arith.constant 0 : i32
    return %arg0, %c0_i32 : i32, i32
  }
  func.func @transform_2(%arg0: i32) -> (i32, i32, i32) {
    %c0_i32 = arith.constant 0 : i32
    %c0_i32_0 = arith.constant 0 : i32
    %c0_i32_1 = arith.constant 0 : i32
    return %c0_i32, %arg0, %c0_i32_0 : i32, i32, i32
  }
  func.func @transform_3(%arg0: i32) -> (i32, i32) {
    %c0_i32 = arith.constant 0 : i32
    %c0_i32_0 = arith.constant 0 : i32
    %c0_i32_1 = arith.constant 0 : i32
    return %c0_i32, %c0_i32_0 : i32, i32
  }
  func.func @transform_4(%arg0: i32) -> (i32, i32) {
    %c0_i32 = arith.constant 0 : i32
    %c0_i32_0 = arith.constant 0 : i32
    %c0_i32_1 = arith.constant 0 : i32
    return %c0_i32, %c0_i32_0 : i32, i32
  }
  func.func @transform_5(%arg0: i32) -> (i32, i32) {
    %c0_i32 = arith.constant 0 : i32
    %c0_i32_0 = arith.constant 0 : i32
    %c0_i32_1 = arith.constant 0 : i32
    return %c0_i32, %c0_i32_0 : i32, i32
  }
  func.func @transform_6(%arg0: i32) -> (i32, i32) {
    %c0_i32 = arith.constant 0 : i32
    %c0_i32_0 = arith.constant 0 : i32
    %c0_i32_1 = arith.constant 0 : i32
    return %c0_i32, %c0_i32_0 : i32, i32
  }
  func.func @transform_7(%arg0: i32) -> (i32, i32) {
    %c0_i32 = arith.constant 0 : i32
    %c0_i32_0 = arith.constant 0 : i32
    %c0_i32_1 = arith.constant 0 : i32
    return %c0_i32, %c0_i32_0 : i32, i32
  }
  func.func @transform_8(%arg0: i32) -> (i32, i32) {
    %c0_i32 = arith.constant 0 : i32
    %c0_i32_0 = arith.constant 0 : i32
    %c0_i32_1 = arith.constant 0 : i32
    return %c0_i32, %c0_i32_0 : i32, i32
  }
  func.func @transform_9(%arg0: i32) -> (i32, i32) {
    %c0_i32 = arith.constant 0 : i32
    %c0_i32_0 = arith.constant 0 : i32
    return %arg0, %c0_i32 : i32, i32
  }
}

</mosaic_0001>

<llo_original>
// kernel: tpu_custom_call.1
$region0: #{tpu_custom_call.1}
  #allocation0 [shape = 'u32[]', space=smem, size = 0x4, offset = 0x4, fixed_abs, tag = 'smem constant byte address 0x4 - core index']
  #allocation1 [shape = 'u32[72,128]{1,0:T(1,128)}', space=vmem, size = 0x9000, scoped, tag = 'internal scratch']
  %s0 = inlined_call_operand.vmem [shape: f32[8], index: 0, kind: input, shape index: {}]
  %s1 = inlined_call_operand.vmem [shape: f32[32,8], index: 1, kind: input, shape index: {}]
  %s2 = inlined_call_operand.vmem [shape: bf16[8,32,8], index: 2, kind: input, shape index: {}]
  %s3 = inlined_call_operand.vmem [shape: f32[8,24], index: 3, kind: input, shape index: {}]
  %s4 = inlined_call_operand.vmem [shape: f32[1,24], index: 4, kind: input, shape index: {}]
  %s5 = inlined_call_operand.vmem [shape: f32[24,128], index: 5, kind: input, shape index: {}]
  %s6 = inlined_call_operand.vmem [shape: f32[1,128], index: 6, kind: input, shape index: {}]
  %s7 = inlined_call_operand.vmem [shape: f32[128,128], index: 7, kind: input, shape index: {}]
  %s8 = inlined_call_operand.vmem [shape: f32[1,128], index: 8, kind: input, shape index: {}]
  %s9 = inlined_call_operand.hbm [shape: f32[32,128], index: 9, kind: output, shape index: {}]
  %s10 = sld [smem:[#allocation0]]
  $region114: #{tpu_custom_call.1} parent=0
    _
  %s12 = ssub.s32 1, %s10
  %s13 = scalar_select 0, %s12, %s10
  $region1: #{tpu_custom_call.1} parent=0
    #allocation2 [shape = 'u8[512]{0}', space=smem, size = 0x200, scoped, tag = 'input window, operand 0, single buffered']
    #allocation3 [shape = 's32[2]{0}', space=sflag, size = 0x8, scoped, tag = 'scoped memory for tpu_custom_call.1']
    #allocation4 [shape = 's32[2]{0}', space=sflag, size = 0x8, scoped, tag = 'scoped memory for tpu_custom_call.1']
    #allocation5 [shape = 'u8[65536]{0}', space=vmem, size = 0x10000, scoped, tag = 'input window, operand 2']
    #allocation6 [shape = 'u8[16384]{0}', space=vmem, size = 0x4000, scoped, tag = 'output window, operand 0']
    %14 = vsyncpa [#allocation4], 0
    %15 = vsyncpa [#allocation3], 0
    %s16 = scalar_lea.sflag [#allocation3], 1
    %17 = vsyncpa %s16, 0
    loop: start=0, step=1, limit=4
    $region2: #{tpu_custom_call.1} parent=1 // loop_pre_header
      _
    $region3: #{tpu_custom_call.1} parent=1 // loop_header
      %s19 = sphi 0, %s23
      %p20 = scmp.ge.s32.totalorder %s19, 4
      %s27 = sphi 0, %s27
      %s29 = sphi 0, %s27
      %s30 = sphi 0, %s29
      %s44 = sphi 0, %s30
      %s50 = sphi 0, %s52
      %s53 = sphi 0, %s50
      %s54 = sphi 0, %s53
      %s70 = sphi 0, %s54
      %s76 = sphi 0, %s78
      %s79 = sphi 0, %s76
      %s80 = sphi 0, %s79
      %s96 = sphi 0, %s80
      %s100 = sphi 0, %s100
      %s102 = sphi 0, %s100
      %s103 = sphi 0, %s102
      %s117 = sphi 0, %s103
      %s121 = sphi 0, %s121
      %s123 = sphi 0, %s121
      %s124 = sphi 0, %s123
      %s138 = sphi 0, %s124
      %s142 = sphi 0, %s142
      %s144 = sphi 0, %s142
      %s145 = sphi 0, %s144
      %s159 = sphi 0, %s145
      %s163 = sphi 0, %s163
      %s165 = sphi 0, %s163
      %s166 = sphi 0, %s165
      %s180 = sphi 0, %s166
      %s184 = sphi 0, %s184
      %s186 = sphi 0, %s184
      %s187 = sphi 0, %s186
      %s201 = sphi 0, %s187
      %s205 = sphi 0, %s205
      %s207 = sphi 0, %s205
      %s208 = sphi 0, %s207
      %s222 = sphi 0, %s208
      %s228 = sphi 0, %s230
      %s231 = sphi 0, %s228
      %s232 = sphi 0, %s231
      %s248 = sphi 0, %s232
    $region4: #{tpu_custom_call.1} parent=1 // loop_header_branch
      %22 = sbr.rel (%p20) target = $region8
    $region5: #{tpu_custom_call.1} parent=1 // loop_body
      %s24 = ssub.s32 %s19, 1
      %s25 = ssub.s32 %s19, 2
      %s26 = sadd.s32 %s19, 1
      %s28 = sadd.s32 %s27, 1
      %p31 = scmp.eq.s32.totalorder %s19, 1
      %p32 = scmp.ne.s32.totalorder %s27, %s29
      %p33 = scmp.eq.s32.totalorder %s19, 0
      %p34 = por %p32, %p33
      %p35 = scmp.ne.s32.totalorder %s27, %s29
      %p36 = scmp.eq.s32.totalorder %s24, 1
      %p37 = por %p35, %p36
      %p38 = scmp.ne.s32.totalorder %s29, %s30
      %p39 = scmp.eq.s32.totalorder %s24, 0
      %p40 = por %p38, %p39
      %p41 = scmp.ne.s32.totalorder %s29, %s30
      %p42 = scmp.eq.s32.totalorder %s25, 1
      %p43 = por %p41, %p42
      %p45 = scmp.ne.s32.totalorder %s30, %s44
      %p46 = scmp.eq.s32.totalorder %s25, 0
      %p47 = por %p45, %p46
      %s48 = ssub.s32 %s19, %s26
      %p49 = scmp.eq.s32.totalorder %s48, 0
      %s51 = sadd.s32 %s50, 1
      %s52 = scalar_select %p49, %s50, %s51
      %p55 = pneg %p49
      %p56 = scmp.eq.s32.totalorder %s19, 1
      %p57 = por %p55, %p56
      %p58 = scmp.ne.s32.totalorder %s50, %s53
      %p59 = scmp.eq.s32.totalorder %s19, 0
      %p60 = por %p58, %p59
      %p61 = scmp.ne.s32.totalorder %s50, %s53
      %p62 = scmp.eq.s32.totalorder %s24, 1
      %p63 = por %p61, %p62
      %p64 = scmp.ne.s32.totalorder %s53, %s54
      %p65 = scmp.eq.s32.totalorder %s24, 0
      %p66 = por %p64, %p65
      %p67 = scmp.ne.s32.totalorder %s53, %s54
      %p68 = scmp.eq.s32.totalorder %s25, 1
      %p69 = por %p67, %p68
      %p71 = scmp.ne.s32.totalorder %s54, %s70
      %p72 = scmp.eq.s32.totalorder %s25, 0
      %p73 = por %p71, %p72
      %s74 = ssub.s32 %s19, %s26
      %p75 = scmp.eq.s32.totalorder %s74, 0
      %s77 = sadd.s32 %s76, 1
      %s78 = scalar_select %p75, %s76, %s77
      %p81 = pneg %p75
      %p82 = scmp.eq.s32.totalorder %s19, 1
      %p83 = por %p81, %p82
      %p84 = scmp.ne.s32.totalorder %s76, %s79
      %p85 = scmp.eq.s32.totalorder %s19, 0
      %p86 = por %p84, %p85
      %p87 = scmp.ne.s32.totalorder %s76, %s79
      %p88 = scmp.eq.s32.totalorder %s24, 1
      %p89 = por %p87, %p88
      %p90 = scmp.ne.s32.totalorder %s79, %s80
      %p91 = scmp.eq.s32.totalorder %s24, 0
      %p92 = por %p90, %p91
      %p93 = scmp.ne.s32.totalorder %s79, %s80
      %p94 = scmp.eq.s32.totalorder %s25, 1
      %p95 = por %p93, %p94
      %p97 = scmp.ne.s32.totalorder %s80, %s96
      %p98 = scmp.eq.s32.totalorder %s25, 0
      %p99 = por %p97, %p98
      %s101 = sadd.s32 %s100, 1
      %p104 = scmp.eq.s32.totalorder %s19, 1
      %p105 = scmp.ne.s32.totalorder %s100, %s102
      %p106 = scmp.eq.s32.totalorder %s19, 0
      %p107 = por %p105, %p106
      %p108 = scmp.ne.s32.totalorder %s100, %s102
      %p109 = scmp.eq.s32.totalorder %s24, 1
      %p110 = por %p108, %p109
      %p111 = scmp.ne.s32.totalorder %s102, %s103
      %p112 = scmp.eq.s32.totalorder %s24, 0
      %p113 = por %p111, %p112
      %p114 = scmp.ne.s32.totalorder %s102, %s103
      %p115 = scmp.eq.s32.totalorder %s25, 1
      %p116 = por %p114, %p115
      %p118 = scmp.ne.s32.totalorder %s103, %s117
      %p119 = scmp.eq.s32.totalorder %s25, 0
      %p120 = por %p118, %p119
      %s122 = sadd.s32 %s121, 1
      %p125 = scmp.eq.s32.totalorder %s19, 1
      %p126 = scmp.ne.s32.totalorder %s121, %s123
      %p127 = scmp.eq.s32.totalorder %s19, 0
      %p128 = por %p126, %p127
      %p129 = scmp.ne.s32.totalorder %s121, %s123
      %p130 = scmp.eq.s32.totalorder %s24, 1
      %p131 = por %p129, %p130
      %p132 = scmp.ne.s32.totalorder %s123, %s124
      %p133 = scmp.eq.s32.totalorder %s24, 0
      %p134 = por %p132, %p133
      %p135 = scmp.ne.s32.totalorder %s123, %s124
      %p136 = scmp.eq.s32.totalorder %s25, 1
      %p137 = por %p135, %p136
      %p139 = scmp.ne.s32.totalorder %s124, %s138
      %p140 = scmp.eq.s32.totalorder %s25, 0
      %p141 = por %p139, %p140
      %s143 = sadd.s32 %s142, 1
      %p146 = scmp.eq.s32.totalorder %s19, 1
      %p147 = scmp.ne.s32.totalorder %s142, %s144
      %p148 = scmp.eq.s32.totalorder %s19, 0
      %p149 = por %p147, %p148
      %p150 = scmp.ne.s32.totalorder %s142, %s144
      %p151 = scmp.eq.s32.totalorder %s24, 1
      %p152 = por %p150, %p151
      %p153 = scmp.ne.s32.totalorder %s144, %s145
      %p154 = scmp.eq.s32.totalorder %s24, 0
      %p155 = por %p153, %p154
      %p156 = scmp.ne.s32.totalorder %s144, %s145
      %p157 = scmp.eq.s32.totalorder %s25, 1
      %p158 = por %p156, %p157
      %p160 = scmp.ne.s32.totalorder %s145, %s159
      %p161 = scmp.eq.s32.totalorder %s25, 0
      %p162 = por %p160, %p161
      %s164 = sadd.s32 %s163, 1
      %p167 = scmp.eq.s32.totalorder %s19, 1
      %p168 = scmp.ne.s32.totalorder %s163, %s165
      %p169 = scmp.eq.s32.totalorder %s19, 0
      %p170 = por %p168, %p169
      %p171 = scmp.ne.s32.totalorder %s163, %s165
      %p172 = scmp.eq.s32.totalorder %s24, 1
      %p173 = por %p171, %p172
      %p174 = scmp.ne.s32.totalorder %s165, %s166
      %p175 = scmp.eq.s32.totalorder %s24, 0
      %p176 = por %p174, %p175
      %p177 = scmp.ne.s32.totalorder %s165, %s166
      %p178 = scmp.eq.s32.totalorder %s25, 1
      %p179 = por %p177, %p178
      %p181 = scmp.ne.s32.totalorder %s166, %s180
      %p182 = scmp.eq.s32.totalorder %s25, 0
      %p183 = por %p181, %p182
      %s185 = sadd.s32 %s184, 1
      %p188 = scmp.eq.s32.totalorder %s19, 1
      %p189 = scmp.ne.s32.totalorder %s184, %s186
      %p190 = scmp.eq.s32.totalorder %s19, 0
      %p191 = por %p189, %p190
      %p192 = scmp.ne.s32.totalorder %s184, %s186
      %p193 = scmp.eq.s32.totalorder %s24, 1
      %p194 = por %p192, %p193
      %p195 = scmp.ne.s32.totalorder %s186, %s187
      %p196 = scmp.eq.s32.totalorder %s24, 0
      %p197 = por %p195, %p196
      %p198 = scmp.ne.s32.totalorder %s186, %s187
      %p199 = scmp.eq.s32.totalorder %s25, 1
      %p200 = por %p198, %p199
      %p202 = scmp.ne.s32.totalorder %s187, %s201
      %p203 = scmp.eq.s32.totalorder %s25, 0
      %p204 = por %p202, %p203
      %s206 = sadd.s32 %s205, 1
      %p209 = scmp.eq.s32.totalorder %s19, 1
      %p210 = scmp.ne.s32.totalorder %s205, %s207
      %p211 = scmp.eq.s32.totalorder %s19, 0
      %p212 = por %p210, %p211
      %p213 = scmp.ne.s32.totalorder %s205, %s207
      %p214 = scmp.eq.s32.totalorder %s24, 1
      %p215 = por %p213, %p214
      %p216 = scmp.ne.s32.totalorder %s207, %s208
      %p217 = scmp.eq.s32.totalorder %s24, 0
      %p218 = por %p216, %p217
      %p219 = scmp.ne.s32.totalorder %s207, %s208
      %p220 = scmp.eq.s32.totalorder %s25, 1
      %p221 = por %p219, %p220
      %p223 = scmp.ne.s32.totalorder %s208, %s222
      %p224 = scmp.eq.s32.totalorder %s25, 0
      %p225 = por %p223, %p224
      %s226 = ssub.s32 %s19, %s26
      %p227 = scmp.eq.s32.totalorder %s226, 0
      %s229 = sadd.s32 %s228, 1
      %s230 = scalar_select %p227, %s228, %s229
      %p233 = pneg %p227
      %p234 = scmp.eq.s32.totalorder %s19, 1
      %p235 = por %p233, %p234
      %p236 = scmp.ne.s32.totalorder %s228, %s231
      %p237 = scmp.eq.s32.totalorder %s19, 0
      %p238 = por %p236, %p237
      %p239 = scmp.ne.s32.totalorder %s228, %s231
      %p240 = scmp.eq.s32.totalorder %s24, 1
      %p241 = por %p239, %p240
      %p242 = scmp.ne.s32.totalorder %s231, %s232
      %p243 = scmp.eq.s32.totalorder %s24, 0
      %p244 = por %p242, %p243
      %p245 = scmp.ne.s32.totalorder %s231, %s232
      %p246 = scmp.eq.s32.totalorder %s25, 1
      %p247 = por %p245, %p246
      %p249 = scmp.ne.s32.totalorder %s232, %s248
      %p250 = scmp.eq.s32.totalorder %s25, 0
      %p251 = por %p249, %p250
      %p252 = scmp.le.s32.totalorder 1, %s19
      %p253 = scmp.lt.s32.totalorder %s19, 3
      %p254 = pnand %p252, %p253
      %p255 = pneg %p254
      // Predicated region
      $region9: #{tpu_custom_call.1} parent=5 // pred_check
        _
      $region10: #{tpu_custom_call.1} parent=5 // pred_check_branch
        %257 = sbr.rel (%p254) target = $region12
      $region11: #{tpu_custom_call.1} parent=5 // pred_region
        %s258 = ssub.s32 %s19, 1
        // Predicated region
        $region13: #{tpu_custom_call.1} parent=11 // pred_check
          %p259 = pneg %p40
        $region14: #{tpu_custom_call.1} parent=11 // pred_check_branch
          %261 = sbr.rel (%p259) target = $region16
        $region15: #{tpu_custom_call.1} parent=11 // pred_region
          %263 = vsyncadd [#allocation4], 0
          %s265 = sshll.u32 %s0, 4
          %s266 = int_to_ptr.vmem [resolvable:$true] %s265
          %268 = dma.vmem_to_smem %s266, 16, [#allocation2], [#allocation4]
        $region16: #{tpu_custom_call.1} parent=11 // pred_fallthru
          _
        // Predicated region
        $region17: #{tpu_custom_call.1} parent=11 // pred_check
          %p269 = pneg %p113
        $region18: #{tpu_custom_call.1} parent=11 // pred_check_branch
          %271 = sbr.rel (%p269) target = $region20
        $region19: #{tpu_custom_call.1} parent=11 // pred_region
          _
        $region20: #{tpu_custom_call.1} parent=11 // pred_fallthru
          _
        // Predicated region
        $region21: #{tpu_custom_call.1} parent=11 // pred_check
          %p272 = pneg %p134
        $region22: #{tpu_custom_call.1} parent=11 // pred_check_branch
          %274 = sbr.rel (%p272) target = $region24
        $region23: #{tpu_custom_call.1} parent=11 // pred_region
          _
        $region24: #{tpu_custom_call.1} parent=11 // pred_fallthru
          _
        // Predicated region
        $region25: #{tpu_custom_call.1} parent=11 // pred_check
          %p275 = pneg %p155
        $region26: #{tpu_custom_call.1} parent=11 // pred_check_branch
          %277 = sbr.rel (%p275) target = $region28
        $region27: #{tpu_custom_call.1} parent=11 // pred_region
          _
        $region28: #{tpu_custom_call.1} parent=11 // pred_fallthru
          _
        // Predicated region
        $region29: #{tpu_custom_call.1} parent=11 // pred_check
          %p278 = pneg %p176
        $region30: #{tpu_custom_call.1} parent=11 // pred_check_branch
          %280 = sbr.rel (%p278) target = $region32
        $region31: #{tpu_custom_call.1} parent=11 // pred_region
          _
        $region32: #{tpu_custom_call.1} parent=11 // pred_fallthru
          _
        // Predicated region
        $region33: #{tpu_custom_call.1} parent=11 // pred_check
          %p281 = pneg %p197
        $region34: #{tpu_custom_call.1} parent=11 // pred_check_branch
          %283 = sbr.rel (%p281) target = $region36
        $region35: #{tpu_custom_call.1} parent=11 // pred_region
          _
        $region36: #{tpu_custom_call.1} parent=11 // pred_fallthru
          _
        // Predicated region
        $region37: #{tpu_custom_call.1} parent=11 // pred_check
          %p284 = pneg %p218
        $region38: #{tpu_custom_call.1} parent=11 // pred_check_branch
          %286 = sbr.rel (%p284) target = $region40
        $region39: #{tpu_custom_call.1} parent=11 // pred_region
          _
        $region40: #{tpu_custom_call.1} parent=11 // pred_fallthru
          _
      $region12: #{tpu_custom_call.1} parent=5 // pred_fallthru
        _
      %p287 = scmp.lt.s32.totalorder %s19, 2
      // Predicated region
      $region41: #{tpu_custom_call.1} parent=5 // pred_check
        %p288 = pneg %p287
      $region42: #{tpu_custom_call.1} parent=5 // pred_check_branch
        %290 = sbr.rel (%p288) target = $region44
      $region43: #{tpu_custom_call.1} parent=5 // pred_region
        // Predicated region
        $region45: #{tpu_custom_call.1} parent=43 // pred_check
          %p291 = pneg %p60
        $region46: #{tpu_custom_call.1} parent=43 // pred_check_branch
          %293 = sbr.rel (%p291) target = $region48
        $region47: #{tpu_custom_call.1} parent=43 // pred_region
          %s294 = smul.u32 2, %s19
          %p295 = scmp.lt.s32.totalorder %s294, 3
          %s296 = scalar_select %p295, %s294, 3
          %s297 = smul.addr %s296, 8
          %s298 = scalar_lea.vmem %s1, %s297
          %s299 = smul.u32 2, %s19
        $region48: #{tpu_custom_call.1} parent=43 // pred_fallthru
          _
        // Predicated region
        $region49: #{tpu_custom_call.1} parent=43 // pred_check
          %p300 = pneg %p86
        $region50: #{tpu_custom_call.1} parent=43 // pred_check_branch
          %302 = sbr.rel (%p300) target = $region52
        $region51: #{tpu_custom_call.1} parent=43 // pred_region
          %s303 = sand.u32 %s76, 1
          %s304 = sand.u32 %s76, 1
          %s305 = smul.addr %s304, 64
          %s306 = scalar_lea.vmem [#allocation5], %s305
          %s307 = smul.u32 2, %s19
          %s308 = smul.addr %s307, 4
          %s309 = scalar_lea.vmem %s2, %s308
          // Predicated region
          $region53: #{tpu_custom_call.1} parent=51 // pred_check
            _
          $region54: #{tpu_custom_call.1} parent=51 // pred_check_branch
            %311 = sbr.rel (0) target = $region56
          $region55: #{tpu_custom_call.1} parent=51 // pred_region
            // Predicated region
            $region57: #{tpu_custom_call.1} parent=55 // pred_check
              _
            $region58: #{tpu_custom_call.1} parent=55 // pred_check_branch
              %313 = sbr.rel target = $region60
            $region59: #{tpu_custom_call.1} parent=55 // pred_region
              // Predicated region
              $region72: #{tpu_custom_call.1} parent=59 // pred_check
                _
              $region73: #{tpu_custom_call.1} parent=59 // pred_check_branch
                %359 = sbr.rel (0) target = $region75
              $region74: #{tpu_custom_call.1} parent=59 // pred_region
                loop: start=0, step=1, limit=1
                $region76: #{tpu_custom_call.1} parent=74 // loop_pre_header
                  _
                $region77: #{tpu_custom_call.1} parent=74 // loop_header
                  %s361 = sphi 0, %s365
                  %p362 = scmp.ge.s32.totalorder %s361, 1
                  %s366 = sphi %s309, %s309
                  %s367 = sphi %s306, %s306
                $region78: #{tpu_custom_call.1} parent=74 // loop_header_branch
                  %364 = sbr.rel (%p362) target = $region82
                $region79: #{tpu_custom_call.1} parent=74 // loop_body
                  _
                $region80: #{tpu_custom_call.1} parent=74 // loop_footer
                  %s365 = sadd.s32 1, %s361
                $region81: #{tpu_custom_call.1} parent=74 // loop_footer_branch
                  %360 = sbr.rel target = $region77
                $region82: #{tpu_custom_call.1} parent=74 // loop_exit
                  _
                %s369 = ssub.s32 16, 1
                loop: start=0, step=1, limit=1
                $region83: #{tpu_custom_call.1} parent=74 // loop_pre_header
                  _
                $region84: #{tpu_custom_call.1} parent=74 // loop_header
                  %s371 = sphi 0, %s375
                  %p372 = scmp.ge.s32.totalorder %s371, 1
                  %s376 = sphi %s309, %s309
                  %s377 = sphi %s306, %s306
                $region85: #{tpu_custom_call.1} parent=74 // loop_header_branch
                  %374 = sbr.rel (%p372) target = $region89
                $region86: #{tpu_custom_call.1} parent=74 // loop_body
                  %v378 = vld [vmem:[%s376] sm:%s369]
                  %379 = vst [vmem:[%s377] sm:%s369] %v378
                  %v380 = vld [vmem:[%s376 + $0x4] sm:%s369]
                  %381 = vst [vmem:[%s377 + $0x4] sm:%s369] %v380
                  %v382 = vld [vmem:[%s376 + $0x10] sm:%s369]
                  %383 = vst [vmem:[%s377 + $0x8] sm:%s369] %v382
                  %v384 = vld [vmem:[%s376 + $0x14] sm:%s369]
                  %385 = vst [vmem:[%s377 + $0xc] sm:%s369] %v384
                  %v386 = vld [vmem:[%s376 + $0x20] sm:%s369]
                  %387 = vst [vmem:[%s377 + $0x10] sm:%s369] %v386
                  %v388 = vld [vmem:[%s376 + $0x24] sm:%s369]
                  %389 = vst [vmem:[%s377 + $0x14] sm:%s369] %v388
                  %v390 = vld [vmem:[%s376 + $0x30] sm:%s369]
                  %391 = vst [vmem:[%s377 + $0x18] sm:%s369] %v390
                  %v392 = vld [vmem:[%s376 + $0x34] sm:%s369]
                  %393 = vst [vmem:[%s377 + $0x1c] sm:%s369] %v392
                  %v394 = vld [vmem:[%s376 + $0x40] sm:%s369]
                  %395 = vst [vmem:[%s377 + $0x20] sm:%s369] %v394
                  %v396 = vld [vmem:[%s376 + $0x44] sm:%s369]
                  %397 = vst [vmem:[%s377 + $0x24] sm:%s369] %v396
                  %v398 = vld [vmem:[%s376 + $0x50] sm:%s369]
                  %399 = vst [vmem:[%s377 + $0x28] sm:%s369] %v398
                  %v400 = vld [vmem:[%s376 + $0x54] sm:%s369]
                  %401 = vst [vmem:[%s377 + $0x2c] sm:%s369] %v400
                  %v402 = vld [vmem:[%s376 + $0x60] sm:%s369]
                  %403 = vst [vmem:[%s377 + $0x30] sm:%s369] %v402
                  %v404 = vld [vmem:[%s376 + $0x64] sm:%s369]
                  %405 = vst [vmem:[%s377 + $0x34] sm:%s369] %v404
                  %v406 = vld [vmem:[%s376 + $0x70] sm:%s369]
                  %407 = vst [vmem:[%s377 + $0x38] sm:%s369] %v406
                  %v408 = vld [vmem:[%s376 + $0x74] sm:%s369]
                  %409 = vst [vmem:[%s377 + $0x3c] sm:%s369] %v408
                $region87: #{tpu_custom_call.1} parent=74 // loop_footer
                  %s375 = sadd.s32 1, %s371
                $region88: #{tpu_custom_call.1} parent=74 // loop_footer_branch
                  %370 = sbr.rel target = $region84
                $region89: #{tpu_custom_call.1} parent=74 // loop_exit
                  _
              $region75: #{tpu_custom_call.1} parent=59 // pred_fallthru
                _
            $region60: #{tpu_custom_call.1} parent=55 // pred_fallthru
              _
            // Predicated region
            $region61: #{tpu_custom_call.1} parent=55 // pred_check
              _
            $region62: #{tpu_custom_call.1} parent=55 // pred_check_branch
              %315 = sbr.rel (0) target = $region64
            $region63: #{tpu_custom_call.1} parent=55 // pred_region
              %s317 = ssub.s32 16, 1
              loop: start=0, step=1, limit=1
              $region65: #{tpu_custom_call.1} parent=63 // loop_pre_header
                _
              $region66: #{tpu_custom_call.1} parent=63 // loop_header
                %s319 = sphi 0, %s323
                %p320 = scmp.ge.s32.totalorder %s319, 1
                %s324 = sphi %s309, %s309
                %s325 = sphi %s306, %s306
              $region67: #{tpu_custom_call.1} parent=63 // loop_header_branch
                %322 = sbr.rel (%p320) target = $region71
              $region68: #{tpu_custom_call.1} parent=63 // loop_body
                %v326 = vld [vmem:[%s324] sm:%s317]
                %327 = vst [vmem:[%s325] sm:%s317] %v326
                %v328 = vld [vmem:[%s324 + $0x4] sm:%s317]
                %329 = vst [vmem:[%s325 + $0x4] sm:%s317] %v328
                %v330 = vld [vmem:[%s324 + $0x10] sm:%s317]
                %331 = vst [vmem:[%s325 + $0x8] sm:%s317] %v330
                %v332 = vld [vmem:[%s324 + $0x14] sm:%s317]
                %333 = vst [vmem:[%s325 + $0xc] sm:%s317] %v332
                %v334 = vld [vmem:[%s324 + $0x20] sm:%s317]
                %335 = vst [vmem:[%s325 + $0x10] sm:%s317] %v334
                %v336 = vld [vmem:[%s324 + $0x24] sm:%s317]
                %337 = vst [vmem:[%s325 + $0x14] sm:%s317] %v336
                %v338 = vld [vmem:[%s324 + $0x30] sm:%s317]
                %339 = vst [vmem:[%s325 + $0x18] sm:%s317] %v338
                %v340 = vld [vmem:[%s324 + $0x34] sm:%s317]
                %341 = vst [vmem:[%s325 + $0x1c] sm:%s317] %v340
                %v342 = vld [vmem:[%s324 + $0x40] sm:%s317]
                %343 = vst [vmem:[%s325 + $0x20] sm:%s317] %v342
                %v344 = vld [vmem:[%s324 + $0x44] sm:%s317]
                %345 = vst [vmem:[%s325 + $0x24] sm:%s317] %v344
                %v346 = vld [vmem:[%s324 + $0x50] sm:%s317]
                %347 = vst [vmem:[%s325 + $0x28] sm:%s317] %v346
                %v348 = vld [vmem:[%s324 + $0x54] sm:%s317]
                %349 = vst [vmem:[%s325 + $0x2c] sm:%s317] %v348
                %v350 = vld [vmem:[%s324 + $0x60] sm:%s317]
                %351 = vst [vmem:[%s325 + $0x30] sm:%s317] %v350
                %v352 = vld [vmem:[%s324 + $0x64] sm:%s317]
                %353 = vst [vmem:[%s325 + $0x34] sm:%s317] %v352
                %v354 = vld [vmem:[%s324 + $0x70] sm:%s317]
                %355 = vst [vmem:[%s325 + $0x38] sm:%s317] %v354
                %v356 = vld [vmem:[%s324 + $0x74] sm:%s317]
                %357 = vst [vmem:[%s325 + $0x3c] sm:%s317] %v356
              $region69: #{tpu_custom_call.1} parent=63 // loop_footer
                %s323 = sadd.s32 1, %s319
              $region70: #{tpu_custom_call.1} parent=63 // loop_footer_branch
                %318 = sbr.rel target = $region66
              $region71: #{tpu_custom_call.1} parent=63 // loop_exit
                _
            $region64: #{tpu_custom_call.1} parent=55 // pred_fallthru
              _
          $region56: #{tpu_custom_call.1} parent=51 // pred_fallthru
            _
          %410 = vnop
        $region52: #{tpu_custom_call.1} parent=43 // pred_fallthru
          _
      $region44: #{tpu_custom_call.1} parent=5 // pred_fallthru
        _
      %p411 = scmp.le.s32.totalorder 1, %s19
      %p412 = scmp.lt.s32.totalorder %s19, 3
      %p413 = pnand %p411, %p412
      %p414 = pneg %p413
      // Predicated region
      $region90: #{tpu_custom_call.1} parent=5 // pred_check
        _
      $region91: #{tpu_custom_call.1} parent=5 // pred_check_branch
        %416 = sbr.rel (%p413) target = $region93
      $region92: #{tpu_custom_call.1} parent=5 // pred_region
        %s417 = ssub.s32 %s19, 1
        // Predicated region
        $region94: #{tpu_custom_call.1} parent=92 // pred_check
          %p418 = pneg %p40
        $region95: #{tpu_custom_call.1} parent=92 // pred_check_branch
          %420 = sbr.rel (%p418) target = $region97
        $region96: #{tpu_custom_call.1} parent=92 // pred_region
          %422 = dma.done [#allocation4], 16
        $region97: #{tpu_custom_call.1} parent=92 // pred_fallthru
          _
        %s423 = sand.u32 %s79, 1
        %s424 = sand.u32 %s79, 1
        %s425 = smul.addr %s424, 64
        %s426 = scalar_lea.vmem [#allocation5], %s425
        // Predicated region
        $region98: #{tpu_custom_call.1} parent=92 // pred_check
          %p427 = pneg %p92
        $region99: #{tpu_custom_call.1} parent=92 // pred_check_branch
          %429 = sbr.rel (%p427) target = $region101
        $region100: #{tpu_custom_call.1} parent=92 // pred_region
          _
        $region101: #{tpu_custom_call.1} parent=92 // pred_fallthru
          _
        %430 = sfence
        %p431 = pneg %p40
        %p432 = pneg %p37
        %s433 = smul.u32 2, %s24
        %p434 = scmp.lt.s32.totalorder %s433, 3
        %s435 = scalar_select %p434, %s433, 3
        %s436 = smul.addr %s435, 8
        %s437 = scalar_lea.vmem %s1, %s436
        %p438 = pneg %p66
        %p439 = pneg %p63
        %s440 = sand.u32 %s79, 1
        %s441 = sand.u32 %s79, 1
        %s442 = smul.addr %s441, 64
        %s443 = scalar_lea.vmem [#allocation5], %s442
        %p444 = pneg %p92
        %p445 = pneg %p89
        %p446 = pneg %p113
        %p447 = pneg %p110
        %p448 = pneg %p134
        %p449 = pneg %p131
        %p450 = pneg %p155
        %p451 = pneg %p152
        %p452 = pneg %p176
        %p453 = pneg %p173
        %p454 = pneg %p197
        %p455 = pneg %p194
        %p456 = pneg %p218
        %p457 = pneg %p215
        %p458 = pneg %p244
        %p459 = pneg %p241
        %s460 = sand.u32 %s231, 1
        %s461 = scalar_lea.sflag [#allocation3], %s460
        %s462 = sand.u32 %s231, 1
        %s463 = smul.addr %s462, 16
        %s464 = scalar_lea.vmem [#allocation6], %s463
        %s465 = smul.u32 2, %s24
        %p466 = scmp.lt.s32.totalorder %s465, 3
        %s467 = scalar_select %p466, %s465, 3
        %s468 = smul.addr %s467, 8
        %s469 = scalar_lea.vmem %s1, %s468
        %s470 = smul.u32 2, %s24
        %s471 = smul.u32 2, %s24
        %s472 = smul.u32 2, %s24
        %v473 = vld [vmem:[%s469] sm:$0xff]
        %v474 = vld [vmem:[%s469 + $0x8] sm:$0xff]
        %v475 = vld [vmem:[%s426] sm:$0xf]
        %v476 = vld [vmem:[%s426 + $0x4] sm:$0xf]
        %v477 = vld [vmem:[%s426 + $0x8] sm:$0xf]
        %v478 = vld [vmem:[%s426 + $0xc] sm:$0xf]
        %v479 = vld [vmem:[%s426 + $0x10] sm:$0xf]
        %v480 = vld [vmem:[%s426 + $0x14] sm:$0xf]
        %v481 = vld [vmem:[%s426 + $0x18] sm:$0xf]
        %v482 = vld [vmem:[%s426 + $0x1c] sm:$0xf]
        %v483 = vld [vmem:[%s426 + $0x20] sm:$0xf]
        %v484 = vld [vmem:[%s426 + $0x24] sm:$0xf]
        %v485 = vld [vmem:[%s426 + $0x28] sm:$0xf]
        %v486 = vld [vmem:[%s426 + $0x2c] sm:$0xf]
        %v487 = vld [vmem:[%s426 + $0x30] sm:$0xf]
        %v488 = vld [vmem:[%s426 + $0x34] sm:$0xf]
        %v489 = vld [vmem:[%s426 + $0x38] sm:$0xf]
        %v490 = vld [vmem:[%s426 + $0x3c] sm:$0xf]
        %v491 = vunpack.c.l.bf16 %v475
        %v492 = vunpack.c.l.bf16 %v476
        %v493 = vunpack.c.l.bf16 %v477
        %v494 = vunpack.c.l.bf16 %v478
        %v495 = vunpack.c.l.bf16 %v479
        %v496 = vunpack.c.l.bf16 %v480
        %v497 = vunpack.c.l.bf16 %v481
        %v498 = vunpack.c.l.bf16 %v482
        %v499 = vunpack.c.l.bf16 %v483
        %v500 = vunpack.c.l.bf16 %v484
        %v501 = vunpack.c.l.bf16 %v485
        %v502 = vunpack.c.l.bf16 %v486
        %v503 = vunpack.c.l.bf16 %v487
        %v504 = vunpack.c.l.bf16 %v488
        %v505 = vunpack.c.l.bf16 %v489
        %v506 = vunpack.c.l.bf16 %v490
        %s507 = sld [smem:[#allocation2]]
        %s508 = sld [smem:[#allocation2 + $0x1]]
        %s509 = sld [smem:[#allocation2 + $0x2]]
        %s510 = sld [smem:[#allocation2 + $0x3]]
        %s511 = sld [smem:[#allocation2 + $0x4]]
        %s512 = sld [smem:[#allocation2 + $0x5]]
        %s513 = sld [smem:[#allocation2 + $0x6]]
        %s514 = sld [smem:[#allocation2 + $0x7]]
        %v515 = vstv %s507
        %v516 = vmul.f32 %v515, %v473
        %v517 = vmul.f32 %v515, %v474
        %v518 = vstv %s508
        %v519 = vmul.f32 %v518, %v473
        %v520 = vmul.f32 %v518, %v474
        %522 = vset.pattern.permute.xlu0 0
        %523 = vperm.xlu0 %522, %v519
        %v524 = vpop.permute.xlu0 %523
        %527 = vset.pattern.permute.xlu0 0
        %528 = vperm.xlu0 %527, %v520
        %v529 = vpop.permute.xlu0 %528
        %v531 = vadd.f32 %v516, %v524
        %v532 = vadd.f32 %v517, %v529
        %v533 = vstv %s509
        %v534 = vmul.f32 %v533, %v491
        %v535 = vmul.f32 %v533, %v492
        %v536 = vadd.f32 %v531, %v534
        %v537 = vadd.f32 %v532, %v535
        %v538 = vstv %s510
        %v539 = vadd.f32 %v536, %v538
        %v540 = vadd.f32 %v537, %v538
        %v541 = vstv %s511
        %v542 = vmul.f32 %v541, %v473
        %v543 = vmul.f32 %v541, %v474
        %v544 = vstv %s512
        %v545 = vmul.f32 %v544, %v473
        %v546 = vmul.f32 %v544, %v474
        %548 = vset.pattern.permute.xlu0 0
        %549 = vperm.xlu0 %548, %v545
        %v550 = vpop.permute.xlu0 %549
        %553 = vset.pattern.permute.xlu0 0
        %554 = vperm.xlu0 %553, %v546
        %v555 = vpop.permute.xlu0 %554
        %v557 = vadd.f32 %v542, %v550
        %v558 = vadd.f32 %v543, %v555
        %v559 = vstv %s513
        %v560 = vmul.f32 %v559, %v491
        %v561 = vmul.f32 %v559, %v492
        %v562 = vadd.f32 %v557, %v560
        %v563 = vadd.f32 %v558, %v561
        %v564 = vstv %s514
        %v565 = vadd.f32 %v562, %v564
        %v566 = vadd.f32 %v563, %v564
        %v567 = vxor.u32 %v539, 2147483648
        %v568 = vxor.u32 %v540, 2147483648
        %v569 = vmul.f32 %v567, 1.442695
        %v570 = vpow.pop %v569
        %v571 = vmul.f32 %v568, 1.442695
        %v572 = vpow.pop %v571
        %v573 = vadd.f32 %v570, 1.0
        %v574 = vadd.f32 %v572, 1.0
        %v575 = vrcp.pop %v573
        %v576 = vmul.f32 %v573, %v575
        %v577 = vsub.f32 1.0, %v576
        %v578 = vmul.f32 %v575, %v577
        %v579 = vadd.f32 %v575, %v578
        %vm580 = vweird.f32 %v573
        %vm581 = vweird.f32 %v575
        %vm582 = vmor %vm580, %vm581
        %v583 = vsel %vm582, %v575, %v579
        %v584 = vand.u32 2147483647, %v573
        %vm585 = vcmp.eq.f32.partialorder %v584, 8.507059e+37
        %v586 = vand.u32 %v573, 2147483648
        %v587 = vor.u32 1.1754944e-38, %v586
        %v588 = vsel %vm585, %v587, %v583
        %v589 = vmul.f32 1.0, %v588
        %v590 = vrcp.pop %v574
        %v591 = vmul.f32 %v574, %v590
        %v592 = vsub.f32 1.0, %v591
        %v593 = vmul.f32 %v590, %v592
        %v594 = vadd.f32 %v590, %v593
        %vm595 = vweird.f32 %v574
        %vm596 = vweird.f32 %v590
        %vm597 = vmor %vm595, %vm596
        %v598 = vsel %vm597, %v590, %v594
        %v599 = vand.u32 2147483647, %v574
        %vm600 = vcmp.eq.f32.partialorder %v599, 8.507059e+37
        %v601 = vand.u32 %v574, 2147483648
        %v602 = vor.u32 1.1754944e-38, %v601
        %v603 = vsel %vm600, %v602, %v598
        %v604 = vmul.f32 1.0, %v603
        %v605 = vmax.f32 %v565, 0.0
        %v606 = vmax.f32 %v566, 0.0
        %vm607 = vcmp.ne.f32.partialorder %v565, %v565
        %vm608 = vcmp.ne.f32.partialorder %v566, %v566
        %v609 = vadd.f32 %v565, 0.0
        %v610 = vadd.f32 %v566, 0.0
        %v611 = vand.u32 2147483647, %v565
        %v612 = vand.u32 2147483647, %v566
        %v613 = vsub.f32 0.0, %v611
        %v614 = vsub.f32 0.0, %v612
        %v615 = vmul.f32 %v613, 1.442695
        %v616 = vpow.pop %v615
        %v617 = vmul.f32 %v614, 1.442695
        %v618 = vpow.pop %v617
        %v619 = vadd.f32 %v616, 1.0
        %v620 = vlog2.pop %v619
        %v621 = vmul.f32 %v620, 0.6931472
        %v622 = vmul.f32 -0.5, %v616
        %v623 = vadd.f32 %v622, 1.0
        %v624 = vmul.f32 %v623, %v616
        %v625 = vand.u32 2147483647, %v616
        %vm626 = vcmp.lt.f32.partialorder %v625, 0.0004427343
        %v627 = vsel %vm626, %v624, %v621
        %v628 = vadd.f32 %v618, 1.0
        %v629 = vlog2.pop %v628
        %v630 = vmul.f32 %v629, 0.6931472
        %v631 = vmul.f32 -0.5, %v618
        %v632 = vadd.f32 %v631, 1.0
        %v633 = vmul.f32 %v632, %v618
        %v634 = vand.u32 2147483647, %v618
        %vm635 = vcmp.lt.f32.partialorder %v634, 0.0004427343
        %v636 = vsel %vm635, %v633, %v630
        %v637 = vadd.f32 %v605, %v627
        %v638 = vadd.f32 %v606, %v636
        %v639 = vsel %vm607, %v609, %v637
        %v640 = vsel %vm608, %v610, %v638
        %v641 = vmul.f32 %v589, %v639
        %v642 = vmul.f32 %v604, %v640
        %vm643 = vcmp.ne.f32.partialorder %v491, 0.0
        %vm644 = vcmp.ne.f32.partialorder %v492, 0.0
        %v645 = vsel %vm643, %v641, 0.0
        %v646 = vsel %vm644, %v642, 0.0
        %v647 = vadd.f32 %v645, 0.0
        %v648 = vadd.f32 %v646, 0.0
        %v649 = vadd.f32 %v491, 0.0
        %v650 = vadd.f32 %v492, 0.0
        %651 = vset.pattern.permute.xlu0 1
        %652 = vperm.xlu0 %651, %v519
        %v653 = vpop.permute.xlu0 %652
        %655 = vset.pattern.permute.xlu0 1
        %656 = vperm.xlu0 %655, %v520
        %v657 = vpop.permute.xlu0 %656
        %v659 = vadd.f32 %v516, %v653
        %v660 = vadd.f32 %v517, %v657
        %v661 = vmul.f32 %v533, %v493
        %v662 = vmul.f32 %v533, %v494
        %v663 = vadd.f32 %v659, %v661
        %v664 = vadd.f32 %v660, %v662
        %v665 = vadd.f32 %v663, %v538
        %v666 = vadd.f32 %v664, %v538
        %667 = vset.pattern.permute.xlu0 1
        %668 = vperm.xlu0 %667, %v545
        %v669 = vpop.permute.xlu0 %668
        %671 = vset.pattern.permute.xlu0 1
        %672 = vperm.xlu0 %671, %v546
        %v673 = vpop.permute.xlu0 %672
        %v675 = vadd.f32 %v542, %v669
        %v676 = vadd.f32 %v543, %v673
        %v677 = vmul.f32 %v559, %v493
        %v678 = vmul.f32 %v559, %v494
        %v679 = vadd.f32 %v675, %v677
        %v680 = vadd.f32 %v676, %v678
        %v681 = vadd.f32 %v679, %v564
        %v682 = vadd.f32 %v680, %v564
        %v683 = vxor.u32 %v665, 2147483648
        %v684 = vxor.u32 %v666, 2147483648
        %v685 = vmul.f32 %v683, 1.442695
        %v686 = vpow.pop %v685
        %v687 = vmul.f32 %v684, 1.442695
        %v688 = vpow.pop %v687
        %v689 = vadd.f32 %v686, 1.0
        %v690 = vadd.f32 %v688, 1.0
        %v691 = vrcp.pop %v689
        %v692 = vmul.f32 %v689, %v691
        %v693 = vsub.f32 1.0, %v692
        %v694 = vmul.f32 %v691, %v693
        %v695 = vadd.f32 %v691, %v694
        %vm696 = vweird.f32 %v689
        %vm697 = vweird.f32 %v691
        %vm698 = vmor %vm696, %vm697
        %v699 = vsel %vm698, %v691, %v695
        %v700 = vand.u32 2147483647, %v689
        %vm701 = vcmp.eq.f32.partialorder %v700, 8.507059e+37
        %v702 = vand.u32 %v689, 2147483648
        %v703 = vor.u32 1.1754944e-38, %v702
        %v704 = vsel %vm701, %v703, %v699
        %v705 = vmul.f32 1.0, %v704
        %v706 = vrcp.pop %v690
        %v707 = vmul.f32 %v690, %v706
        %v708 = vsub.f32 1.0, %v707
        %v709 = vmul.f32 %v706, %v708
        %v710 = vadd.f32 %v706, %v709
        %vm711 = vweird.f32 %v690
        %vm712 = vweird.f32 %v706
        %vm713 = vmor %vm711, %vm712
        %v714 = vsel %vm713, %v706, %v710
        %v715 = vand.u32 2147483647, %v690
        %vm716 = vcmp.eq.f32.partialorder %v715, 8.507059e+37
        %v717 = vand.u32 %v690, 2147483648
        %v718 = vor.u32 1.1754944e-38, %v717
        %v719 = vsel %vm716, %v718, %v714
        %v720 = vmul.f32 1.0, %v719
        %v721 = vmax.f32 %v681, 0.0
        %v722 = vmax.f32 %v682, 0.0
        %vm723 = vcmp.ne.f32.partialorder %v681, %v681
        %vm724 = vcmp.ne.f32.partialorder %v682, %v682
        %v725 = vadd.f32 %v681, 0.0
        %v726 = vadd.f32 %v682, 0.0
        %v727 = vand.u32 2147483647, %v681
        %v728 = vand.u32 2147483647, %v682
        %v729 = vsub.f32 0.0, %v727
        %v730 = vsub.f32 0.0, %v728
        %v731 = vmul.f32 %v729, 1.442695
        %v732 = vpow.pop %v731
        %v733 = vmul.f32 %v730, 1.442695
        %v734 = vpow.pop %v733
        %v735 = vadd.f32 %v732, 1.0
        %v736 = vlog2.pop %v735
        %v737 = vmul.f32 %v736, 0.6931472
        %v738 = vmul.f32 -0.5, %v732
        %v739 = vadd.f32 %v738, 1.0
        %v740 = vmul.f32 %v739, %v732
        %v741 = vand.u32 2147483647, %v732
        %vm742 = vcmp.lt.f32.partialorder %v741, 0.0004427343
        %v743 = vsel %vm742, %v740, %v737
        %v744 = vadd.f32 %v734, 1.0
        %v745 = vlog2.pop %v744
        %v746 = vmul.f32 %v745, 0.6931472
        %v747 = vmul.f32 -0.5, %v734
        %v748 = vadd.f32 %v747, 1.0
        %v749 = vmul.f32 %v748, %v734
        %v750 = vand.u32 2147483647, %v734
        %vm751 = vcmp.lt.f32.partialorder %v750, 0.0004427343
        %v752 = vsel %vm751, %v749, %v746
        %v753 = vadd.f32 %v721, %v743
        %v754 = vadd.f32 %v722, %v752
        %v755 = vsel %vm723, %v725, %v753
        %v756 = vsel %vm724, %v726, %v754
        %v757 = vmul.f32 %v705, %v755
        %v758 = vmul.f32 %v720, %v756
        %vm759 = vcmp.ne.f32.partialorder %v493, 0.0
        %vm760 = vcmp.ne.f32.partialorder %v494, 0.0
        %v761 = vsel %vm759, %v757, 0.0
        %v762 = vsel %vm760, %v758, 0.0
        %v763 = vadd.f32 %v647, %v761
        %v764 = vadd.f32 %v648, %v762
        %v765 = vadd.f32 %v649, %v493
        %v766 = vadd.f32 %v650, %v494
        %767 = vset.pattern.permute.xlu0 2
        %768 = vperm.xlu0 %767, %v519
        %v769 = vpop.permute.xlu0 %768
        %771 = vset.pattern.permute.xlu0 2
        %772 = vperm.xlu0 %771, %v520
        %v773 = vpop.permute.xlu0 %772
        %v775 = vadd.f32 %v516, %v769
        %v776 = vadd.f32 %v517, %v773
        %v777 = vmul.f32 %v533, %v495
        %v778 = vmul.f32 %v533, %v496
        %v779 = vadd.f32 %v775, %v777
        %v780 = vadd.f32 %v776, %v778
        %v781 = vadd.f32 %v779, %v538
        %v782 = vadd.f32 %v780, %v538
        %783 = vset.pattern.permute.xlu0 2
        %784 = vperm.xlu0 %783, %v545
        %v785 = vpop.permute.xlu0 %784
        %787 = vset.pattern.permute.xlu0 2
        %788 = vperm.xlu0 %787, %v546
        %v789 = vpop.permute.xlu0 %788
        %v791 = vadd.f32 %v542, %v785
        %v792 = vadd.f32 %v543, %v789
        %v793 = vmul.f32 %v559, %v495
        %v794 = vmul.f32 %v559, %v496
        %v795 = vadd.f32 %v791, %v793
        %v796 = vadd.f32 %v792, %v794
        %v797 = vadd.f32 %v795, %v564
        %v798 = vadd.f32 %v796, %v564
        %v799 = vxor.u32 %v781, 2147483648
        %v800 = vxor.u32 %v782, 2147483648
        %v801 = vmul.f32 %v799, 1.442695
        %v802 = vpow.pop %v801
        %v803 = vmul.f32 %v800, 1.442695
        %v804 = vpow.pop %v803
        %v805 = vadd.f32 %v802, 1.0
        %v806 = vadd.f32 %v804, 1.0
        %v807 = vrcp.pop %v805
        %v808 = vmul.f32 %v805, %v807
        %v809 = vsub.f32 1.0, %v808
        %v810 = vmul.f32 %v807, %v809
        %v811 = vadd.f32 %v807, %v810
        %vm812 = vweird.f32 %v805
        %vm813 = vweird.f32 %v807
        %vm814 = vmor %vm812, %vm813
        %v815 = vsel %vm814, %v807, %v811
        %v816 = vand.u32 2147483647, %v805
        %vm817 = vcmp.eq.f32.partialorder %v816, 8.507059e+37
        %v818 = vand.u32 %v805, 2147483648
        %v819 = vor.u32 1.1754944e-38, %v818
        %v820 = vsel %vm817, %v819, %v815
        %v821 = vmul.f32 1.0, %v820
        %v822 = vrcp.pop %v806
        %v823 = vmul.f32 %v806, %v822
        %v824 = vsub.f32 1.0, %v823
        %v825 = vmul.f32 %v822, %v824
        %v826 = vadd.f32 %v822, %v825
        %vm827 = vweird.f32 %v806
        %vm828 = vweird.f32 %v822
        %vm829 = vmor %vm827, %vm828
        %v830 = vsel %vm829, %v822, %v826
        %v831 = vand.u32 2147483647, %v806
        %vm832 = vcmp.eq.f32.partialorder %v831, 8.507059e+37
        %v833 = vand.u32 %v806, 2147483648
        %v834 = vor.u32 1.1754944e-38, %v833
        %v835 = vsel %vm832, %v834, %v830
        %v836 = vmul.f32 1.0, %v835
        %v837 = vmax.f32 %v797, 0.0
        %v838 = vmax.f32 %v798, 0.0
        %vm839 = vcmp.ne.f32.partialorder %v797, %v797
        %vm840 = vcmp.ne.f32.partialorder %v798, %v798
        %v841 = vadd.f32 %v797, 0.0
        %v842 = vadd.f32 %v798, 0.0
        %v843 = vand.u32 2147483647, %v797
        %v844 = vand.u32 2147483647, %v798
        %v845 = vsub.f32 0.0, %v843
        %v846 = vsub.f32 0.0, %v844
        %v847 = vmul.f32 %v845, 1.442695
        %v848 = vpow.pop %v847
        %v849 = vmul.f32 %v846, 1.442695
        %v850 = vpow.pop %v849
        %v851 = vadd.f32 %v848, 1.0
        %v852 = vlog2.pop %v851
        %v853 = vmul.f32 %v852, 0.6931472
        %v854 = vmul.f32 -0.5, %v848
        %v855 = vadd.f32 %v854, 1.0
        %v856 = vmul.f32 %v855, %v848
        %v857 = vand.u32 2147483647, %v848
        %vm858 = vcmp.lt.f32.partialorder %v857, 0.0004427343
        %v859 = vsel %vm858, %v856, %v853
        %v860 = vadd.f32 %v850, 1.0
        %v861 = vlog2.pop %v860
        %v862 = vmul.f32 %v861, 0.6931472
        %v863 = vmul.f32 -0.5, %v850
        %v864 = vadd.f32 %v863, 1.0
        %v865 = vmul.f32 %v864, %v850
        %v866 = vand.u32 2147483647, %v850
        %vm867 = vcmp.lt.f32.partialorder %v866, 0.0004427343
        %v868 = vsel %vm867, %v865, %v862
        %v869 = vadd.f32 %v837, %v859
        %v870 = vadd.f32 %v838, %v868
        %v871 = vsel %vm839, %v841, %v869
        %v872 = vsel %vm840, %v842, %v870
        %v873 = vmul.f32 %v821, %v871
        %v874 = vmul.f32 %v836, %v872
        %vm875 = vcmp.ne.f32.partialorder %v495, 0.0
        %vm876 = vcmp.ne.f32.partialorder %v496, 0.0
        %v877 = vsel %vm875, %v873, 0.0
        %v878 = vsel %vm876, %v874, 0.0
        %v879 = vadd.f32 %v763, %v877
        %v880 = vadd.f32 %v764, %v878
        %v881 = vadd.f32 %v765, %v495
        %v882 = vadd.f32 %v766, %v496
        %883 = vset.pattern.permute.xlu0 3
        %884 = vperm.xlu0 %883, %v519
        %v885 = vpop.permute.xlu0 %884
        %887 = vset.pattern.permute.xlu0 3
        %888 = vperm.xlu0 %887, %v520
        %v889 = vpop.permute.xlu0 %888
        %v891 = vadd.f32 %v516, %v885
        %v892 = vadd.f32 %v517, %v889
        %v893 = vmul.f32 %v533, %v497
        %v894 = vmul.f32 %v533, %v498
        %v895 = vadd.f32 %v891, %v893
        %v896 = vadd.f32 %v892, %v894
        %v897 = vadd.f32 %v895, %v538
        %v898 = vadd.f32 %v896, %v538
        %899 = vset.pattern.permute.xlu0 3
        %900 = vperm.xlu0 %899, %v545
        %v901 = vpop.permute.xlu0 %900
        %903 = vset.pattern.permute.xlu0 3
        %904 = vperm.xlu0 %903, %v546
        %v905 = vpop.permute.xlu0 %904
        %v907 = vadd.f32 %v542, %v901
        %v908 = vadd.f32 %v543, %v905
        %v909 = vmul.f32 %v559, %v497
        %v910 = vmul.f32 %v559, %v498
        %v911 = vadd.f32 %v907, %v909
        %v912 = vadd.f32 %v908, %v910
        %v913 = vadd.f32 %v911, %v564
        %v914 = vadd.f32 %v912, %v564
        %v915 = vxor.u32 %v897, 2147483648
        %v916 = vxor.u32 %v898, 2147483648
        %v917 = vmul.f32 %v915, 1.442695
        %v918 = vpow.pop %v917
        %v919 = vmul.f32 %v916, 1.442695
        %v920 = vpow.pop %v919
        %v921 = vadd.f32 %v918, 1.0
        %v922 = vadd.f32 %v920, 1.0
        %v923 = vrcp.pop %v921
        %v924 = vmul.f32 %v921, %v923
        %v925 = vsub.f32 1.0, %v924
        %v926 = vmul.f32 %v923, %v925
        %v927 = vadd.f32 %v923, %v926
        %vm928 = vweird.f32 %v921
        %vm929 = vweird.f32 %v923
        %vm930 = vmor %vm928, %vm929
        %v931 = vsel %vm930, %v923, %v927
        %v932 = vand.u32 2147483647, %v921
        %vm933 = vcmp.eq.f32.partialorder %v932, 8.507059e+37
        %v934 = vand.u32 %v921, 2147483648
        %v935 = vor.u32 1.1754944e-38, %v934
        %v936 = vsel %vm933, %v935, %v931
        %v937 = vmul.f32 1.0, %v936
        %v938 = vrcp.pop %v922
        %v939 = vmul.f32 %v922, %v938
        %v940 = vsub.f32 1.0, %v939
        %v941 = vmul.f32 %v938, %v940
        %v942 = vadd.f32 %v938, %v941
        %vm943 = vweird.f32 %v922
        %vm944 = vweird.f32 %v938
        %vm945 = vmor %vm943, %vm944
        %v946 = vsel %vm945, %v938, %v942
        %v947 = vand.u32 2147483647, %v922
        %vm948 = vcmp.eq.f32.partialorder %v947, 8.507059e+37
        %v949 = vand.u32 %v922, 2147483648
        %v950 = vor.u32 1.1754944e-38, %v949
        %v951 = vsel %vm948, %v950, %v946
        %v952 = vmul.f32 1.0, %v951
        %v953 = vmax.f32 %v913, 0.0
        %v954 = vmax.f32 %v914, 0.0
        %vm955 = vcmp.ne.f32.partialorder %v913, %v913
        %vm956 = vcmp.ne.f32.partialorder %v914, %v914
        %v957 = vadd.f32 %v913, 0.0
        %v958 = vadd.f32 %v914, 0.0
        %v959 = vand.u32 2147483647, %v913
        %v960 = vand.u32 2147483647, %v914
        %v961 = vsub.f32 0.0, %v959
        %v962 = vsub.f32 0.0, %v960
        %v963 = vmul.f32 %v961, 1.442695
        %v964 = vpow.pop %v963
        %v965 = vmul.f32 %v962, 1.442695
        %v966 = vpow.pop %v965
        %v967 = vadd.f32 %v964, 1.0
        %v968 = vlog2.pop %v967
        %v969 = vmul.f32 %v968, 0.6931472
        %v970 = vmul.f32 -0.5, %v964
        %v971 = vadd.f32 %v970, 1.0
        %v972 = vmul.f32 %v971, %v964
        %v973 = vand.u32 2147483647, %v964
        %vm974 = vcmp.lt.f32.partialorder %v973, 0.0004427343
        %v975 = vsel %vm974, %v972, %v969
        %v976 = vadd.f32 %v966, 1.0
        %v977 = vlog2.pop %v976
        %v978 = vmul.f32 %v977, 0.6931472
        %v979 = vmul.f32 -0.5, %v966
        %v980 = vadd.f32 %v979, 1.0
        %v981 = vmul.f32 %v980, %v966
        %v982 = vand.u32 2147483647, %v966
        %vm983 = vcmp.lt.f32.partialorder %v982, 0.0004427343
        %v984 = vsel %vm983, %v981, %v978
        %v985 = vadd.f32 %v953, %v975
        %v986 = vadd.f32 %v954, %v984
        %v987 = vsel %vm955, %v957, %v985
        %v988 = vsel %vm956, %v958, %v986
        %v989 = vmul.f32 %v937, %v987
        %v990 = vmul.f32 %v952, %v988
        %vm991 = vcmp.ne.f32.partialorder %v497, 0.0
        %vm992 = vcmp.ne.f32.partialorder %v498, 0.0
        %v993 = vsel %vm991, %v989, 0.0
        %v994 = vsel %vm992, %v990, 0.0
        %v995 = vadd.f32 %v879, %v993
        %v996 = vadd.f32 %v880, %v994
        %v997 = vadd.f32 %v881, %v497
        %v998 = vadd.f32 %v882, %v498
        %999 = vset.pattern.permute.xlu0 4
        %1000 = vperm.xlu0 %999, %v519
        %v1001 = vpop.permute.xlu0 %1000
        %1003 = vset.pattern.permute.xlu0 4
        %1004 = vperm.xlu0 %1003, %v520
        %v1005 = vpop.permute.xlu0 %1004
        %v1007 = vadd.f32 %v516, %v1001
        %v1008 = vadd.f32 %v517, %v1005
        %v1009 = vmul.f32 %v533, %v499
        %v1010 = vmul.f32 %v533, %v500
        %v1011 = vadd.f32 %v1007, %v1009
        %v1012 = vadd.f32 %v1008, %v1010
        %v1013 = vadd.f32 %v1011, %v538
        %v1014 = vadd.f32 %v1012, %v538
        %1015 = vset.pattern.permute.xlu0 4
        %1016 = vperm.xlu0 %1015, %v545
        %v1017 = vpop.permute.xlu0 %1016
        %1019 = vset.pattern.permute.xlu0 4
        %1020 = vperm.xlu0 %1019, %v546
        %v1021 = vpop.permute.xlu0 %1020
        %v1023 = vadd.f32 %v542, %v1017
        %v1024 = vadd.f32 %v543, %v1021
        %v1025 = vmul.f32 %v559, %v499
        %v1026 = vmul.f32 %v559, %v500
        %v1027 = vadd.f32 %v1023, %v1025
        %v1028 = vadd.f32 %v1024, %v1026
        %v1029 = vadd.f32 %v1027, %v564
        %v1030 = vadd.f32 %v1028, %v564
        %v1031 = vxor.u32 %v1013, 2147483648
        %v1032 = vxor.u32 %v1014, 2147483648
        %v1033 = vmul.f32 %v1031, 1.442695
        %v1034 = vpow.pop %v1033
        %v1035 = vmul.f32 %v1032, 1.442695
        %v1036 = vpow.pop %v1035
        %v1037 = vadd.f32 %v1034, 1.0
        %v1038 = vadd.f32 %v1036, 1.0
        %v1039 = vrcp.pop %v1037
        %v1040 = vmul.f32 %v1037, %v1039
        %v1041 = vsub.f32 1.0, %v1040
        %v1042 = vmul.f32 %v1039, %v1041
        %v1043 = vadd.f32 %v1039, %v1042
        %vm1044 = vweird.f32 %v1037
        %vm1045 = vweird.f32 %v1039
        %vm1046 = vmor %vm1044, %vm1045
        %v1047 = vsel %vm1046, %v1039, %v1043
        %v1048 = vand.u32 2147483647, %v1037
        %vm1049 = vcmp.eq.f32.partialorder %v1048, 8.507059e+37
        %v1050 = vand.u32 %v1037, 2147483648
        %v1051 = vor.u32 1.1754944e-38, %v1050
        %v1052 = vsel %vm1049, %v1051, %v1047
        %v1053 = vmul.f32 1.0, %v1052
        %v1054 = vrcp.pop %v1038
        %v1055 = vmul.f32 %v1038, %v1054
        %v1056 = vsub.f32 1.0, %v1055
        %v1057 = vmul.f32 %v1054, %v1056
        %v1058 = vadd.f32 %v1054, %v1057
        %vm1059 = vweird.f32 %v1038
        %vm1060 = vweird.f32 %v1054
        %vm1061 = vmor %vm1059, %vm1060
        %v1062 = vsel %vm1061, %v1054, %v1058
        %v1063 = vand.u32 2147483647, %v1038
        %vm1064 = vcmp.eq.f32.partialorder %v1063, 8.507059e+37
        %v1065 = vand.u32 %v1038, 2147483648
        %v1066 = vor.u32 1.1754944e-38, %v1065
        %v1067 = vsel %vm1064, %v1066, %v1062
        %v1068 = vmul.f32 1.0, %v1067
        %v1069 = vmax.f32 %v1029, 0.0
        %v1070 = vmax.f32 %v1030, 0.0
        %vm1071 = vcmp.ne.f32.partialorder %v1029, %v1029
        %vm1072 = vcmp.ne.f32.partialorder %v1030, %v1030
        %v1073 = vadd.f32 %v1029, 0.0
        %v1074 = vadd.f32 %v1030, 0.0
        %v1075 = vand.u32 2147483647, %v1029
        %v1076 = vand.u32 2147483647, %v1030
        %v1077 = vsub.f32 0.0, %v1075
        %v1078 = vsub.f32 0.0, %v1076
        %v1079 = vmul.f32 %v1077, 1.442695
        %v1080 = vpow.pop %v1079
        %v1081 = vmul.f32 %v1078, 1.442695
        %v1082 = vpow.pop %v1081
        %v1083 = vadd.f32 %v1080, 1.0
        %v1084 = vlog2.pop %v1083
        %v1085 = vmul.f32 %v1084, 0.6931472
        %v1086 = vmul.f32 -0.5, %v1080
        %v1087 = vadd.f32 %v1086, 1.0
        %v1088 = vmul.f32 %v1087, %v1080
        %v1089 = vand.u32 2147483647, %v1080
        %vm1090 = vcmp.lt.f32.partialorder %v1089, 0.0004427343
        %v1091 = vsel %vm1090, %v1088, %v1085
        %v1092 = vadd.f32 %v1082, 1.0
        %v1093 = vlog2.pop %v1092
        %v1094 = vmul.f32 %v1093, 0.6931472
        %v1095 = vmul.f32 -0.5, %v1082
        %v1096 = vadd.f32 %v1095, 1.0
        %v1097 = vmul.f32 %v1096, %v1082
        %v1098 = vand.u32 2147483647, %v1082
        %vm1099 = vcmp.lt.f32.partialorder %v1098, 0.0004427343
        %v1100 = vsel %vm1099, %v1097, %v1094
        %v1101 = vadd.f32 %v1069, %v1091
        %v1102 = vadd.f32 %v1070, %v1100
        %v1103 = vsel %vm1071, %v1073, %v1101
        %v1104 = vsel %vm1072, %v1074, %v1102
        %v1105 = vmul.f32 %v1053, %v1103
        %v1106 = vmul.f32 %v1068, %v1104
        %vm1107 = vcmp.ne.f32.partialorder %v499, 0.0
        %vm1108 = vcmp.ne.f32.partialorder %v500, 0.0
        %v1109 = vsel %vm1107, %v1105, 0.0
        %v1110 = vsel %vm1108, %v1106, 0.0
        %v1111 = vadd.f32 %v995, %v1109
        %v1112 = vadd.f32 %v996, %v1110
        %v1113 = vadd.f32 %v997, %v499
        %v1114 = vadd.f32 %v998, %v500
        %1115 = vset.pattern.permute.xlu0 5
        %1116 = vperm.xlu0 %1115, %v519
        %v1117 = vpop.permute.xlu0 %1116
        %1119 = vset.pattern.permute.xlu0 5
        %1120 = vperm.xlu0 %1119, %v520
        %v1121 = vpop.permute.xlu0 %1120
        %v1123 = vadd.f32 %v516, %v1117
        %v1124 = vadd.f32 %v517, %v1121
        %v1125 = vmul.f32 %v533, %v501
        %v1126 = vmul.f32 %v533, %v502
        %v1127 = vadd.f32 %v1123, %v1125
        %v1128 = vadd.f32 %v1124, %v1126
        %v1129 = vadd.f32 %v1127, %v538
        %v1130 = vadd.f32 %v1128, %v538
        %1131 = vset.pattern.permute.xlu0 5
        %1132 = vperm.xlu0 %1131, %v545
        %v1133 = vpop.permute.xlu0 %1132
        %1135 = vset.pattern.permute.xlu0 5
        %1136 = vperm.xlu0 %1135, %v546
        %v1137 = vpop.permute.xlu0 %1136
        %v1139 = vadd.f32 %v542, %v1133
        %v1140 = vadd.f32 %v543, %v1137
        %v1141 = vmul.f32 %v559, %v501
        %v1142 = vmul.f32 %v559, %v502
        %v1143 = vadd.f32 %v1139, %v1141
        %v1144 = vadd.f32 %v1140, %v1142
        %v1145 = vadd.f32 %v1143, %v564
        %v1146 = vadd.f32 %v1144, %v564
        %v1147 = vxor.u32 %v1129, 2147483648
        %v1148 = vxor.u32 %v1130, 2147483648
        %v1149 = vmul.f32 %v1147, 1.442695
        %v1150 = vpow.pop %v1149
        %v1151 = vmul.f32 %v1148, 1.442695
        %v1152 = vpow.pop %v1151
        %v1153 = vadd.f32 %v1150, 1.0
        %v1154 = vadd.f32 %v1152, 1.0
        %v1155 = vrcp.pop %v1153
        %v1156 = vmul.f32 %v1153, %v1155
        %v1157 = vsub.f32 1.0, %v1156
        %v1158 = vmul.f32 %v1155, %v1157
        %v1159 = vadd.f32 %v1155, %v1158
        %vm1160 = vweird.f32 %v1153
        %vm1161 = vweird.f32 %v1155
        %vm1162 = vmor %vm1160, %vm1161
        %v1163 = vsel %vm1162, %v1155, %v1159
        %v1164 = vand.u32 2147483647, %v1153
        %vm1165 = vcmp.eq.f32.partialorder %v1164, 8.507059e+37
        %v1166 = vand.u32 %v1153, 2147483648
        %v1167 = vor.u32 1.1754944e-38, %v1166
        %v1168 = vsel %vm1165, %v1167, %v1163
        %v1169 = vmul.f32 1.0, %v1168
        %v1170 = vrcp.pop %v1154
        %v1171 = vmul.f32 %v1154, %v1170
        %v1172 = vsub.f32 1.0, %v1171
        %v1173 = vmul.f32 %v1170, %v1172
        %v1174 = vadd.f32 %v1170, %v1173
        %vm1175 = vweird.f32 %v1154
        %vm1176 = vweird.f32 %v1170
        %vm1177 = vmor %vm1175, %vm1176
        %v1178 = vsel %vm1177, %v1170, %v1174
        %v1179 = vand.u32 2147483647, %v1154
        %vm1180 = vcmp.eq.f32.partialorder %v1179, 8.507059e+37
        %v1181 = vand.u32 %v1154, 2147483648
        %v1182 = vor.u32 1.1754944e-38, %v1181
        %v1183 = vsel %vm1180, %v1182, %v1178
        %v1184 = vmul.f32 1.0, %v1183
        %v1185 = vmax.f32 %v1145, 0.0
        %v1186 = vmax.f32 %v1146, 0.0
        %vm1187 = vcmp.ne.f32.partialorder %v1145, %v1145
        %vm1188 = vcmp.ne.f32.partialorder %v1146, %v1146
        %v1189 = vadd.f32 %v1145, 0.0
        %v1190 = vadd.f32 %v1146, 0.0
        %v1191 = vand.u32 2147483647, %v1145
        %v1192 = vand.u32 2147483647, %v1146
        %v1193 = vsub.f32 0.0, %v1191
        %v1194 = vsub.f32 0.0, %v1192
        %v1195 = vmul.f32 %v1193, 1.442695
        %v1196 = vpow.pop %v1195
        %v1197 = vmul.f32 %v1194, 1.442695
        %v1198 = vpow.pop %v1197
        %v1199 = vadd.f32 %v1196, 1.0
        %v1200 = vlog2.pop %v1199
        %v1201 = vmul.f32 %v1200, 0.6931472
        %v1202 = vmul.f32 -0.5, %v1196
        %v1203 = vadd.f32 %v1202, 1.0
        %v1204 = vmul.f32 %v1203, %v1196
        %v1205 = vand.u32 2147483647, %v1196
        %vm1206 = vcmp.lt.f32.partialorder %v1205, 0.0004427343
        %v1207 = vsel %vm1206, %v1204, %v1201
        %v1208 = vadd.f32 %v1198, 1.0
        %v1209 = vlog2.pop %v1208
        %v1210 = vmul.f32 %v1209, 0.6931472
        %v1211 = vmul.f32 -0.5, %v1198
        %v1212 = vadd.f32 %v1211, 1.0
        %v1213 = vmul.f32 %v1212, %v1198
        %v1214 = vand.u32 2147483647, %v1198
        %vm1215 = vcmp.lt.f32.partialorder %v1214, 0.0004427343
        %v1216 = vsel %vm1215, %v1213, %v1210
        %v1217 = vadd.f32 %v1185, %v1207
        %v1218 = vadd.f32 %v1186, %v1216
        %v1219 = vsel %vm1187, %v1189, %v1217
        %v1220 = vsel %vm1188, %v1190, %v1218
        %v1221 = vmul.f32 %v1169, %v1219
        %v1222 = vmul.f32 %v1184, %v1220
        %vm1223 = vcmp.ne.f32.partialorder %v501, 0.0
        %vm1224 = vcmp.ne.f32.partialorder %v502, 0.0
        %v1225 = vsel %vm1223, %v1221, 0.0
        %v1226 = vsel %vm1224, %v1222, 0.0
        %v1227 = vadd.f32 %v1111, %v1225
        %v1228 = vadd.f32 %v1112, %v1226
        %v1229 = vadd.f32 %v1113, %v501
        %v1230 = vadd.f32 %v1114, %v502
        %1231 = vset.pattern.permute.xlu0 6
        %1232 = vperm.xlu0 %1231, %v519
        %v1233 = vpop.permute.xlu0 %1232
        %1235 = vset.pattern.permute.xlu0 6
        %1236 = vperm.xlu0 %1235, %v520
        %v1237 = vpop.permute.xlu0 %1236
        %v1239 = vadd.f32 %v516, %v1233
        %v1240 = vadd.f32 %v517, %v1237
        %v1241 = vmul.f32 %v533, %v503
        %v1242 = vmul.f32 %v533, %v504
        %v1243 = vadd.f32 %v1239, %v1241
        %v1244 = vadd.f32 %v1240, %v1242
        %v1245 = vadd.f32 %v1243, %v538
        %v1246 = vadd.f32 %v1244, %v538
        %1247 = vset.pattern.permute.xlu0 6
        %1248 = vperm.xlu0 %1247, %v545
        %v1249 = vpop.permute.xlu0 %1248
        %1251 = vset.pattern.permute.xlu0 6
        %1252 = vperm.xlu0 %1251, %v546
        %v1253 = vpop.permute.xlu0 %1252
        %v1255 = vadd.f32 %v542, %v1249
        %v1256 = vadd.f32 %v543, %v1253
        %v1257 = vmul.f32 %v559, %v503
        %v1258 = vmul.f32 %v559, %v504
        %v1259 = vadd.f32 %v1255, %v1257
        %v1260 = vadd.f32 %v1256, %v1258
        %v1261 = vadd.f32 %v1259, %v564
        %v1262 = vadd.f32 %v1260, %v564
        %v1263 = vxor.u32 %v1245, 2147483648
        %v1264 = vxor.u32 %v1246, 2147483648
        %v1265 = vmul.f32 %v1263, 1.442695
        %v1266 = vpow.pop %v1265
        %v1267 = vmul.f32 %v1264, 1.442695
        %v1268 = vpow.pop %v1267
        %v1269 = vadd.f32 %v1266, 1.0
        %v1270 = vadd.f32 %v1268, 1.0
        %v1271 = vrcp.pop %v1269
        %v1272 = vmul.f32 %v1269, %v1271
        %v1273 = vsub.f32 1.0, %v1272
        %v1274 = vmul.f32 %v1271, %v1273
        %v1275 = vadd.f32 %v1271, %v1274
        %vm1276 = vweird.f32 %v1269
        %vm1277 = vweird.f32 %v1271
        %vm1278 = vmor %vm1276, %vm1277
        %v1279 = vsel %vm1278, %v1271, %v1275
        %v1280 = vand.u32 2147483647, %v1269
        %vm1281 = vcmp.eq.f32.partialorder %v1280, 8.507059e+37
        %v1282 = vand.u32 %v1269, 2147483648
        %v1283 = vor.u32 1.1754944e-38, %v1282
        %v1284 = vsel %vm1281, %v1283, %v1279
        %v1285 = vmul.f32 1.0, %v1284
        %v1286 = vrcp.pop %v1270
        %v1287 = vmul.f32 %v1270, %v1286
        %v1288 = vsub.f32 1.0, %v1287
        %v1289 = vmul.f32 %v1286, %v1288
        %v1290 = vadd.f32 %v1286, %v1289
        %vm1291 = vweird.f32 %v1270
        %vm1292 = vweird.f32 %v1286
        %vm1293 = vmor %vm1291, %vm1292
        %v1294 = vsel %vm1293, %v1286, %v1290
        %v1295 = vand.u32 2147483647, %v1270
        %vm1296 = vcmp.eq.f32.partialorder %v1295, 8.507059e+37
        %v1297 = vand.u32 %v1270, 2147483648
        %v1298 = vor.u32 1.1754944e-38, %v1297
        %v1299 = vsel %vm1296, %v1298, %v1294
        %v1300 = vmul.f32 1.0, %v1299
        %v1301 = vmax.f32 %v1261, 0.0
        %v1302 = vmax.f32 %v1262, 0.0
        %vm1303 = vcmp.ne.f32.partialorder %v1261, %v1261
        %vm1304 = vcmp.ne.f32.partialorder %v1262, %v1262
        %v1305 = vadd.f32 %v1261, 0.0
        %v1306 = vadd.f32 %v1262, 0.0
        %v1307 = vand.u32 2147483647, %v1261
        %v1308 = vand.u32 2147483647, %v1262
        %v1309 = vsub.f32 0.0, %v1307
        %v1310 = vsub.f32 0.0, %v1308
        %v1311 = vmul.f32 %v1309, 1.442695
        %v1312 = vpow.pop %v1311
        %v1313 = vmul.f32 %v1310, 1.442695
        %v1314 = vpow.pop %v1313
        %v1315 = vadd.f32 %v1312, 1.0
        %v1316 = vlog2.pop %v1315
        %v1317 = vmul.f32 %v1316, 0.6931472
        %v1318 = vmul.f32 -0.5, %v1312
        %v1319 = vadd.f32 %v1318, 1.0
        %v1320 = vmul.f32 %v1319, %v1312
        %v1321 = vand.u32 2147483647, %v1312
        %vm1322 = vcmp.lt.f32.partialorder %v1321, 0.0004427343
        %v1323 = vsel %vm1322, %v1320, %v1317
        %v1324 = vadd.f32 %v1314, 1.0
        %v1325 = vlog2.pop %v1324
        %v1326 = vmul.f32 %v1325, 0.6931472
        %v1327 = vmul.f32 -0.5, %v1314
        %v1328 = vadd.f32 %v1327, 1.0
        %v1329 = vmul.f32 %v1328, %v1314
        %v1330 = vand.u32 2147483647, %v1314
        %vm1331 = vcmp.lt.f32.partialorder %v1330, 0.0004427343
        %v1332 = vsel %vm1331, %v1329, %v1326
        %v1333 = vadd.f32 %v1301, %v1323
        %v1334 = vadd.f32 %v1302, %v1332
        %v1335 = vsel %vm1303, %v1305, %v1333
        %v1336 = vsel %vm1304, %v1306, %v1334
        %v1337 = vmul.f32 %v1285, %v1335
        %v1338 = vmul.f32 %v1300, %v1336
        %vm1339 = vcmp.ne.f32.partialorder %v503, 0.0
        %vm1340 = vcmp.ne.f32.partialorder %v504, 0.0
        %v1341 = vsel %vm1339, %v1337, 0.0
        %v1342 = vsel %vm1340, %v1338, 0.0
        %v1343 = vadd.f32 %v1227, %v1341
        %v1344 = vadd.f32 %v1228, %v1342
        %v1345 = vadd.f32 %v1229, %v503
        %v1346 = vadd.f32 %v1230, %v504
        %1347 = vset.pattern.permute.xlu0 7
        %1348 = vperm.xlu0 %1347, %v519
        %v1349 = vpop.permute.xlu0 %1348
        %1351 = vset.pattern.permute.xlu0 7
        %1352 = vperm.xlu0 %1351, %v520
        %v1353 = vpop.permute.xlu0 %1352
        %v1355 = vadd.f32 %v516, %v1349
        %v1356 = vadd.f32 %v517, %v1353
        %v1357 = vmul.f32 %v533, %v505
        %v1358 = vmul.f32 %v533, %v506
        %v1359 = vadd.f32 %v1355, %v1357
        %v1360 = vadd.f32 %v1356, %v1358
        %v1361 = vadd.f32 %v1359, %v538
        %v1362 = vadd.f32 %v1360, %v538
        %1363 = vset.pattern.permute.xlu0 7
        %1364 = vperm.xlu0 %1363, %v545
        %v1365 = vpop.permute.xlu0 %1364
        %1367 = vset.pattern.permute.xlu0 7
        %1368 = vperm.xlu0 %1367, %v546
        %v1369 = vpop.permute.xlu0 %1368
        %v1371 = vadd.f32 %v542, %v1365
        %v1372 = vadd.f32 %v543, %v1369
        %v1373 = vmul.f32 %v559, %v505
        %v1374 = vmul.f32 %v559, %v506
        %v1375 = vadd.f32 %v1371, %v1373
        %v1376 = vadd.f32 %v1372, %v1374
        %v1377 = vadd.f32 %v1375, %v564
        %v1378 = vadd.f32 %v1376, %v564
        %v1379 = vxor.u32 %v1361, 2147483648
        %v1380 = vxor.u32 %v1362, 2147483648
        %v1381 = vmul.f32 %v1379, 1.442695
        %v1382 = vpow.pop %v1381
        %v1383 = vmul.f32 %v1380, 1.442695
        %v1384 = vpow.pop %v1383
        %v1385 = vadd.f32 %v1382, 1.0
        %v1386 = vadd.f32 %v1384, 1.0
        %v1387 = vrcp.pop %v1385
        %v1388 = vmul.f32 %v1385, %v1387
        %v1389 = vsub.f32 1.0, %v1388
        %v1390 = vmul.f32 %v1387, %v1389
        %v1391 = vadd.f32 %v1387, %v1390
        %vm1392 = vweird.f32 %v1385
        %vm1393 = vweird.f32 %v1387
        %vm1394 = vmor %vm1392, %vm1393
        %v1395 = vsel %vm1394, %v1387, %v1391
        %v1396 = vand.u32 2147483647, %v1385
        %vm1397 = vcmp.eq.f32.partialorder %v1396, 8.507059e+37
        %v1398 = vand.u32 %v1385, 2147483648
        %v1399 = vor.u32 1.1754944e-38, %v1398
        %v1400 = vsel %vm1397, %v1399, %v1395
        %v1401 = vmul.f32 1.0, %v1400
        %v1402 = vrcp.pop %v1386
        %v1403 = vmul.f32 %v1386, %v1402
        %v1404 = vsub.f32 1.0, %v1403
        %v1405 = vmul.f32 %v1402, %v1404
        %v1406 = vadd.f32 %v1402, %v1405
        %vm1407 = vweird.f32 %v1386
        %vm1408 = vweird.f32 %v1402
        %vm1409 = vmor %vm1407, %vm1408
        %v1410 = vsel %vm1409, %v1402, %v1406
        %v1411 = vand.u32 2147483647, %v1386
        %vm1412 = vcmp.eq.f32.partialorder %v1411, 8.507059e+37
        %v1413 = vand.u32 %v1386, 2147483648
        %v1414 = vor.u32 1.1754944e-38, %v1413
        %v1415 = vsel %vm1412, %v1414, %v1410
        %v1416 = vmul.f32 1.0, %v1415
        %v1417 = vmax.f32 %v1377, 0.0
        %v1418 = vmax.f32 %v1378, 0.0
        %vm1419 = vcmp.ne.f32.partialorder %v1377, %v1377
        %vm1420 = vcmp.ne.f32.partialorder %v1378, %v1378
        %v1421 = vadd.f32 %v1377, 0.0
        %v1422 = vadd.f32 %v1378, 0.0
        %v1423 = vand.u32 2147483647, %v1377
        %v1424 = vand.u32 2147483647, %v1378
        %v1425 = vsub.f32 0.0, %v1423
        %v1426 = vsub.f32 0.0, %v1424
        %v1427 = vmul.f32 %v1425, 1.442695
        %v1428 = vpow.pop %v1427
        %v1429 = vmul.f32 %v1426, 1.442695
        %v1430 = vpow.pop %v1429
        %v1431 = vadd.f32 %v1428, 1.0
        %v1432 = vlog2.pop %v1431
        %v1433 = vmul.f32 %v1432, 0.6931472
        %v1434 = vmul.f32 -0.5, %v1428
        %v1435 = vadd.f32 %v1434, 1.0
        %v1436 = vmul.f32 %v1435, %v1428
        %v1437 = vand.u32 2147483647, %v1428
        %vm1438 = vcmp.lt.f32.partialorder %v1437, 0.0004427343
        %v1439 = vsel %vm1438, %v1436, %v1433
        %v1440 = vadd.f32 %v1430, 1.0
        %v1441 = vlog2.pop %v1440
        %v1442 = vmul.f32 %v1441, 0.6931472
        %v1443 = vmul.f32 -0.5, %v1430
        %v1444 = vadd.f32 %v1443, 1.0
        %v1445 = vmul.f32 %v1444, %v1430
        %v1446 = vand.u32 2147483647, %v1430
        %vm1447 = vcmp.lt.f32.partialorder %v1446, 0.0004427343
        %v1448 = vsel %vm1447, %v1445, %v1442
        %v1449 = vadd.f32 %v1417, %v1439
        %v1450 = vadd.f32 %v1418, %v1448
        %v1451 = vsel %vm1419, %v1421, %v1449
        %v1452 = vsel %vm1420, %v1422, %v1450
        %v1453 = vmul.f32 %v1401, %v1451
        %v1454 = vmul.f32 %v1416, %v1452
        %vm1455 = vcmp.ne.f32.partialorder %v505, 0.0
        %vm1456 = vcmp.ne.f32.partialorder %v506, 0.0
        %v1457 = vsel %vm1455, %v1453, 0.0
        %v1458 = vsel %vm1456, %v1454, 0.0
        %v1459 = vadd.f32 %v1343, %v1457
        %v1460 = vadd.f32 %v1344, %v1458
        %v1461 = vadd.f32 %v1345, %v505
        %v1462 = vadd.f32 %v1346, %v506
        %v1463 = vadd.f32 %v473, %v1459
        %v1464 = vadd.f32 %v474, %v1460
        %v1465 = vmax.f32 %v1463, 0.0
        %v1466 = vmax.f32 %v1464, 0.0
        %vm1467 = vcmp.gt.f32.partialorder %v1461, 0.0
        %vm1468 = vcmp.gt.f32.partialorder %v1462, 0.0
        %v1469 = vrsqrt.pop %v1461
        %v1470 = vmul.f32 %v1469, %v1461
        %v1471 = vmul.f32 %v1470, %v1469
        %v1472 = vmul.f32 0.5, %v1471
        %v1473 = vsub.f32 1.5, %v1472
        %v1474 = vmul.f32 %v1469, %v1473
        %vm1475 = vweird.f32 %v1461
        %vm1476 = vweird.f32 %v1469
        %vm1477 = vmor %vm1475, %vm1476
        %v1478 = vsel %vm1477, %v1469, %v1474
        %v1479 = vrsqrt.pop %v1462
        %v1480 = vmul.f32 %v1479, %v1462
        %v1481 = vmul.f32 %v1480, %v1479
        %v1482 = vmul.f32 0.5, %v1481
        %v1483 = vsub.f32 1.5, %v1482
        %v1484 = vmul.f32 %v1479, %v1483
        %vm1485 = vweird.f32 %v1462
        %vm1486 = vweird.f32 %v1479
        %vm1487 = vmor %vm1485, %vm1486
        %v1488 = vsel %vm1487, %v1479, %v1484
        %v1489 = vsel %vm1467, %v1478, 0.0
        %v1490 = vsel %vm1468, %v1488, 0.0
        %v1491 = vmul.f32 %v1489, %v1465
        %v1492 = vmul.f32 %v1490, %v1466
        %1494 = vset.pattern.permute.xlu0 0
        %1495 = vperm.xlu0 %1494, %v1491
        %v1496 = vpop.permute.xlu0 %1495
        %1499 = vset.pattern.permute.xlu0 0
        %1500 = vperm.xlu0 %1499, %v1492
        %v1501 = vpop.permute.xlu0 %1500
        %v1503 = vmul.f32 %v491, %v1496
        %v1504 = vmul.f32 %v492, %v1501
        %v1505 = vadd.f32 %v1503, 0.0
        %v1506 = vadd.f32 %v1504, 0.0
        %1507 = vset.pattern.permute.xlu0 1
        %1508 = vperm.xlu0 %1507, %v1491
        %v1509 = vpop.permute.xlu0 %1508
        %1511 = vset.pattern.permute.xlu0 1
        %1512 = vperm.xlu0 %1511, %v1492
        %v1513 = vpop.permute.xlu0 %1512
        %v1515 = vmul.f32 %v493, %v1509
        %v1516 = vmul.f32 %v494, %v1513
        %v1517 = vadd.f32 %v1505, %v1515
        %v1518 = vadd.f32 %v1506, %v1516
        %1519 = vset.pattern.permute.xlu0 2
        %1520 = vperm.xlu0 %1519, %v1491
        %v1521 = vpop.permute.xlu0 %1520
        %1523 = vset.pattern.permute.xlu0 2
        %1524 = vperm.xlu0 %1523, %v1492
        %v1525 = vpop.permute.xlu0 %1524
        %v1527 = vmul.f32 %v495, %v1521
        %v1528 = vmul.f32 %v496, %v1525
        %v1529 = vadd.f32 %v1517, %v1527
        %v1530 = vadd.f32 %v1518, %v1528
        %1531 = vset.pattern.permute.xlu0 3
        %1532 = vperm.xlu0 %1531, %v1491
        %v1533 = vpop.permute.xlu0 %1532
        %1535 = vset.pattern.permute.xlu0 3
        %1536 = vperm.xlu0 %1535, %v1492
        %v1537 = vpop.permute.xlu0 %1536
        %v1539 = vmul.f32 %v497, %v1533
        %v1540 = vmul.f32 %v498, %v1537
        %v1541 = vadd.f32 %v1529, %v1539
        %v1542 = vadd.f32 %v1530, %v1540
        %1543 = vset.pattern.permute.xlu0 4
        %1544 = vperm.xlu0 %1543, %v1491
        %v1545 = vpop.permute.xlu0 %1544
        %1547 = vset.pattern.permute.xlu0 4
        %1548 = vperm.xlu0 %1547, %v1492
        %v1549 = vpop.permute.xlu0 %1548
        %v1551 = vmul.f32 %v499, %v1545
        %v1552 = vmul.f32 %v500, %v1549
        %v1553 = vadd.f32 %v1541, %v1551
        %v1554 = vadd.f32 %v1542, %v1552
        %1555 = vset.pattern.permute.xlu0 5
        %1556 = vperm.xlu0 %1555, %v1491
        %v1557 = vpop.permute.xlu0 %1556
        %1559 = vset.pattern.permute.xlu0 5
        %1560 = vperm.xlu0 %1559, %v1492
        %v1561 = vpop.permute.xlu0 %1560
        %v1563 = vmul.f32 %v501, %v1557
        %v1564 = vmul.f32 %v502, %v1561
        %v1565 = vadd.f32 %v1553, %v1563
        %v1566 = vadd.f32 %v1554, %v1564
        %1567 = vset.pattern.permute.xlu0 6
        %1568 = vperm.xlu0 %1567, %v1491
        %v1569 = vpop.permute.xlu0 %1568
        %1571 = vset.pattern.permute.xlu0 6
        %1572 = vperm.xlu0 %1571, %v1492
        %v1573 = vpop.permute.xlu0 %1572
        %v1575 = vmul.f32 %v503, %v1569
        %v1576 = vmul.f32 %v504, %v1573
        %v1577 = vadd.f32 %v1565, %v1575
        %v1578 = vadd.f32 %v1566, %v1576
        %1579 = vset.pattern.permute.xlu0 7
        %1580 = vperm.xlu0 %1579, %v1491
        %v1581 = vpop.permute.xlu0 %1580
        %1583 = vset.pattern.permute.xlu0 7
        %1584 = vperm.xlu0 %1583, %v1492
        %v1585 = vpop.permute.xlu0 %1584
        %v1587 = vmul.f32 %v505, %v1581
        %v1588 = vmul.f32 %v506, %v1585
        %v1589 = vadd.f32 %v1577, %v1587
        %v1590 = vadd.f32 %v1578, %v1588
        %v1591 = vmul.f32 %v1489, %v1589
        %v1592 = vmul.f32 %v1490, %v1590
        %v1593 = vld [vmem:[%s3] sm:$0xff]
        %v1594 = vld [vmem:[%s4] sm:$0x1]
        %v1596 = vperm.slane %v1594, 0
        %vm1598 = vcmask 64512
        %v1600 = vsel %vm1598, %v1591, 0
        %v1603 = vsel %vm1598, %v1592, 0
        %1605 = vmatpush.msra.mxu0 0.0
        %1606 = vmatpush.msra.mxu0 0.0
        %1607 = vmatpush.msra.mxu0 0.0
        %1608 = vmatpush.msra.mxu0 0.0
        %1609 = vmatpush.msra.mxu0 0.0
        %1610 = vmatpush.msra.mxu0 0.0
        %1611 = vmatpush.msra.mxu0 0.0
        %1612 = vmatpush.msra.mxu0 0.0
        %1613 = vmatpush.msra.mxu0 0.0
        %1614 = vmatpush.msra.mxu0 0.0
        %1615 = vmatpush.msra.mxu0 0.0
        %1616 = vmatpush.msra.mxu0 0.0
        %1617 = vmatpush.msra.mxu0 0.0
        %1618 = vmatpush.msra.mxu0 0.0
        %1619 = vmatpush.msra.mxu0 0.0
        %1620 = vmatpush.msra.mxu0 %v1593
        %1621 = vmatmul.f32.gmra.mxu0 %v1600
        %v1622 = vpop.f32.mrf.mxu0
        %v1623 = vadd.f32 %v1596, %v1622
        %1624 = vmatmul.f32.gmra.mxu0 %v1603
        %v1625 = vpop.f32.mrf.mxu0
        %v1626 = vadd.f32 %v1596, %v1625
        %1627 = vdwg.mxu0
        %v1628 = vmax.f32 %v1623, 0.0
        %v1629 = vmax.f32 %v1626, 0.0
        %v1630 = vld [vmem:[%s5] sm:$0xff]
        %v1631 = vld [vmem:[%s5 + $0x8] sm:$0xff]
        %v1632 = vld [vmem:[%s5 + $0x10] sm:$0xff]
        %v1633 = vld [vmem:[%s6] sm:$0x1]
        %v1635 = vperm.slane %v1633, 0
        %vm1637 = vcmask 195584
        %v1639 = vsel %vm1637, %v1628, 0
        %v1642 = vsel %vm1637, %v1629, 0
        %1644 = vmatpush.msra.mxu0 0.0
        %1645 = vmatpush.msra.mxu0 0.0
        %1646 = vmatpush.msra.mxu0 0.0
        %1647 = vmatpush.msra.mxu0 0.0
        %1648 = vmatpush.msra.mxu0 0.0
        %1649 = vmatpush.msra.mxu0 0.0
        %1650 = vmatpush.msra.mxu0 0.0
        %1651 = vmatpush.msra.mxu0 0.0
        %1652 = vmatpush.msra.mxu0 0.0
        %1653 = vmatpush.msra.mxu0 0.0
        %1654 = vmatpush.msra.mxu0 0.0
        %1655 = vmatpush.msra.mxu0 0.0
        %1656 = vmatpush.msra.mxu0 0.0
        %1657 = vmatpush.msra.mxu0 %v1632
        %1658 = vmatpush.msra.mxu0 %v1631
        %1659 = vmatpush.msra.mxu0 %v1630
        %1660 = vmatmul.f32.gmra.mxu0 %v1639
        %v1661 = vpop.f32.mrf.mxu0
        %v1662 = vadd.f32 %v1635, %v1661
        %1663 = vmatmul.f32.gmra.mxu0 %v1642
        %v1664 = vpop.f32.mrf.mxu0
        %v1665 = vadd.f32 %v1635, %v1664
        %1666 = vdwg.mxu0
        %v1667 = vmax.f32 %v1662, 0.0
        %v1668 = vmax.f32 %v1665, 0.0
        %v1669 = vld [vmem:[%s7] sm:$0xff]
        %v1670 = vld [vmem:[%s7 + $0x8] sm:$0xff]
        %v1671 = vld [vmem:[%s7 + $0x10] sm:$0xff]
        %v1672 = vld [vmem:[%s7 + $0x18] sm:$0xff]
        %v1673 = vld [vmem:[%s7 + $0x20] sm:$0xff]
        %v1674 = vld [vmem:[%s7 + $0x28] sm:$0xff]
        %v1675 = vld [vmem:[%s7 + $0x30] sm:$0xff]
        %v1676 = vld [vmem:[%s7 + $0x38] sm:$0xff]
        %v1677 = vld [vmem:[%s7 + $0x40] sm:$0xff]
        %v1678 = vld [vmem:[%s7 + $0x48] sm:$0xff]
        %v1679 = vld [vmem:[%s7 + $0x50] sm:$0xff]
        %v1680 = vld [vmem:[%s7 + $0x58] sm:$0xff]
        %v1681 = vld [vmem:[%s7 + $0x60] sm:$0xff]
        %v1682 = vld [vmem:[%s7 + $0x68] sm:$0xff]
        %v1683 = vld [vmem:[%s7 + $0x70] sm:$0xff]
        %v1684 = vld [vmem:[%s7 + $0x78] sm:$0xff]
        %v1685 = vld [vmem:[%s8] sm:$0x1]
        %v1687 = vperm.slane %v1685, 0
        %1689 = vmatpush.msra.mxu0 %v1684
        %1690 = vmatpush.msra.mxu0 %v1683
        %1691 = vmatpush.msra.mxu0 %v1682
        %1692 = vmatpush.msra.mxu0 %v1681
        %1693 = vmatpush.msra.mxu0 %v1680
        %1694 = vmatpush.msra.mxu0 %v1679
        %1695 = vmatpush.msra.mxu0 %v1678
        %1696 = vmatpush.msra.mxu0 %v1677
        %1697 = vmatpush.msra.mxu0 %v1676
        %1698 = vmatpush.msra.mxu0 %v1675
        %1699 = vmatpush.msra.mxu0 %v1674
        %1700 = vmatpush.msra.mxu0 %v1673
        %1701 = vmatpush.msra.mxu0 %v1672
        %1702 = vmatpush.msra.mxu0 %v1671
        %1703 = vmatpush.msra.mxu0 %v1670
        %1704 = vmatpush.msra.mxu0 %v1669
        %1705 = vmatmul.f32.gmra.mxu0 %v1667
        %v1706 = vpop.f32.mrf.mxu0
        %v1707 = vadd.f32 %v1687, %v1706
        %1708 = vmatmul.f32.gmra.mxu0 %v1668
        %v1709 = vpop.f32.mrf.mxu0
        %v1710 = vadd.f32 %v1687, %v1709
        %1711 = vdwg.mxu0
        %v1712 = vmax.f32 %v1707, 0.0
        %v1713 = vmax.f32 %v1710, 0.0
        %1714 = vst [vmem:[%s464] sm:$0xff] %v1712
        %1715 = vst [vmem:[%s464 + $0x8] sm:$0xff] %v1713
        %s1716 = sand.u32 %s231, 1
        %s1717 = scalar_lea.sflag [#allocation3], %s1716
        %s1718 = sand.u32 %s231, 1
        %s1719 = smul.addr %s1718, 16
        %s1720 = scalar_lea.vmem [#allocation6], %s1719
        // Predicated region
        $region102: #{tpu_custom_call.1} parent=92 // pred_check
          %p1721 = pneg %p241
        $region103: #{tpu_custom_call.1} parent=92 // pred_check_branch
          %1723 = sbr.rel (%p1721) target = $region105
        $region104: #{tpu_custom_call.1} parent=92 // pred_region
          %s1724 = smul.u32 2, %s24
          %1726 = vsyncadd %s1717, 0
          %s1727 = smul.addr %s1724, 8
          %s1728 = scalar_lea.hbm %s9, %s1727
          %s1729 = sshll.u32 %s1720, 4
          %s1730 = int_to_ptr.vmem [resolvable:$true] %s1729
          %s1731 = sshll.u32 %s1728, 4
          %s1732 = int_to_ptr.hbm [resolvable:$true] %s1731
          %1737 = dma.vmem_to_hbm [thread:$0]  %s1730, 256, %s1732, %s1717, 128, 128, 8
        $region105: #{tpu_custom_call.1} parent=92 // pred_fallthru
          _
      $region93: #{tpu_custom_call.1} parent=5 // pred_fallthru
        _
      %p1738 = scmp.le.s32.totalorder 2, %s19
      // Predicated region
      $region106: #{tpu_custom_call.1} parent=5 // pred_check
        %p1739 = pneg %p1738
      $region107: #{tpu_custom_call.1} parent=5 // pred_check_branch
        %1741 = sbr.rel (%p1739) target = $region109
      $region108: #{tpu_custom_call.1} parent=5 // pred_region
        %s1742 = ssub.s32 %s19, 2
        // Predicated region
        $region110: #{tpu_custom_call.1} parent=108 // pred_check
          %p1743 = pneg %p247
        $region111: #{tpu_custom_call.1} parent=108 // pred_check_branch
          %1745 = sbr.rel (%p1743) target = $region113
        $region112: #{tpu_custom_call.1} parent=108 // pred_region
          %s1746 = sand.u32 %s232, 1
          %s1747 = scalar_lea.sflag [#allocation3], %s1746
          %s1748 = sand.u32 %s232, 1
          %s1749 = smul.addr %s1748, 16
          %s1750 = scalar_lea.vmem [#allocation6], %s1749
          %1752 = dma.done %s1747, 256
        $region113: #{tpu_custom_call.1} parent=108 // pred_fallthru
          _
      $region109: #{tpu_custom_call.1} parent=5 // pred_fallthru
        _
    $region6: #{tpu_custom_call.1} parent=1 // loop_footer
      %s23 = sadd.s32 1, %s19
    $region7: #{tpu_custom_call.1} parent=1 // loop_footer_branch
      %18 = sbr.rel target = $region3
    $region8: #{tpu_custom_call.1} parent=1 // loop_exit
      _
    %1753 = vsyncpa [#allocation3], 1
    %s1754 = scalar_lea.sflag [#allocation3], 1
    %1755 = vsyncpa %s1754, 1
    %1756 = vsyncpa [#allocation4], 1
    %s1757 = scalar_lea.sflag [#allocation4], 1
    %1758 = vsyncpa %s1757, 1

</llo_original>
